<compile_context>
chip_gen: v6e
topology: v6e:2x2x1
jax: 0.10.0
libtpu: 0.0.40
codegen_flags: <defaults>
</compile_context>

<pallas_src>
from functools import partial

import numpy as np
import jax
import jax.numpy as jnp
from jax import lax
from jax.experimental import pallas as pl
from jax.experimental.pallas import tpu as pltpu

_BN_EPS = 1e-5


def aspp_kernel(shifts_ref, wproj_ref,        # SMEM scalars
                x_ref, wall_ref,              # VMEM tensors
                o_ref,
                t_ref,                        # VMEM scratch: padded tap planes
                *, H, W, WL, pad, K, rates, inv_hw):
    """One grid step == one image.

    x_ref    : (1, C, SP)  dense bf16 image, flattened spatial (SP >= H*W)
    wall_ref : (K, C)      stacked tap weights, bf16, BN scale folded in
    o_ref    : (1, 1, H*WL) lane-dense output block (wrapper crops WL -> W)
    t_ref    : (K, Hp*WL)  f32 scratch; per-tap plane row-strided by WL (mult of
                           128) with physical zeros in pad rows / cols [W, WL)
    """
    base = pad * WL                 # flat offset of output pixel (0, 0)
    Lwin = H * WL                   # flat length of one output window

    # Pad rows / pad columns must be zero every step (scratch persists across
    # grid steps and is per-core under "parallel" semantics, so re-zero).
    t_ref[...] = jnp.zeros_like(t_ref)

    # --- single MXU matmul: every tap response at every pixel (bf16 -> f32) ---
    taps = jnp.dot(wall_ref[...], x_ref[0],
                   preferred_element_type=jnp.float32)        # (K, SP) f32

    # Scatter pixel rows into the 128-strided padded layout.  Column starts are
    # multiples of WL (vreg-aligned stores).
    # TODO(synk): chunk this matmul+scatter over row groups for very large H*W.
    for h in range(H):
        t_ref[:, pl.ds((pad + h) * WL, W)] = taps[:, h * W:(h + 1) * W]

    def window(k, di):
        # Vertical tap offset di -> 128-aligned lane offset: cheap offset read.
        return t_ref[pl.ds(k, 1), pl.ds(base + di * WL, Lwin)]   # (1, Lwin)

    def hshift(v, dj):
        # y[p] = v[p + dj] with zero fill (matches conv zero padding; the zero
        # columns [W, WL) of each row already cover in-row boundary cases).
        if dj == 0:
            return v
        if dj > 0:
            return jnp.concatenate(
                [v[:, dj:], jnp.zeros((1, dj), v.dtype)], axis=1)
        return jnp.concatenate(
            [jnp.zeros((1, -dj), v.dtype), v[:, :dj]], axis=1)

    # ---- branch 0: 1x1 conv + BN + ReLU --------------------------------------
    out = wproj_ref[0] * jnp.maximum(window(0, 0) + shifts_ref[0], 0.0)

    # ---- dilated 3x3 branches: taps grouped by horizontal offset j so each
    # rate needs at most 2 small lane shifts (on i-summed partials). -----------
    for ri, r in enumerate(rates):
        k0 = 1 + 9 * ri
        acc = None
        for j in range(3):
            dj = (j - 1) * r
            pj = None
            for i in range(3):
                di = (i - 1) * r
                w = window(k0 + i * 3 + j, di)                 # aligned read
                pj = w if pj is None else pj + w
            pj = hshift(pj, dj)
            acc = pj if acc is None else acc + pj
        out = out + wproj_ref[1 + ri] * jnp.maximum(acc + shifts_ref[1 + ri], 0.0)

    # ---- pooling branch: zero padding contributes nothing to the pool tap, so
    # the per-image mean is a full-plane reduction; BN + ReLU on the scalar and
    # fold back as an additive term (bilinear resize of a 1x1 == broadcast). ---
    pool_sum = jnp.sum(t_ref[pl.ds(K - 1, 1), :])
    pooled = jnp.maximum(pool_sum * inv_hw + shifts_ref[4], 0.0)
    out = out + wproj_ref[4] * pooled

    # ---- project: 1x1 conv over the 5 branches (folded scalars) + BN + ReLU --
    # TODO(synk): Dropout(0.5) is identity in eval mode.
    o_ref[...] = jnp.maximum(out + shifts_ref[5], 0.0).reshape(1, 1, Lwin)


def aspp_pallas(x_nchw, w0, w3_list, wpool, wproj, rates,
                *, compute_dtype=jnp.bfloat16):
    """x_nchw: (N, C, H, W); conv weights in PyTorch OIHW layout.

    compute_dtype=bf16 feeds the MXU at peak on v5e/v6e/v7x and halves input
    HBM traffic; accumulation and all post-matmul math stay in f32.
    """
    N, C, H, W = x_nchw.shape
    R = len(rates)
    pad = max(rates)
    K = 2 + 9 * R                              # 1x1 + R*9 dilated taps + pool 1x1
    WL = 128 * pl.cdiv(W + pad, 128)           # row stride: keeps vertical tap
    assert W + pad <= WL                       # offsets vreg-aligned
    Hp = H + 2 * pad
    Lwin = H * WL
    LSCR = Hp * WL
    S = H * W
    SP = 128 * pl.cdiv(S, 128)                 # lane-dense dense-image width

    # BatchNorm (eval, default params) folded into the (bias-free) convs.
    scale = float(1.0 / np.sqrt(1.0 + _BN_EPS))   # gamma / sqrt(var + eps)
    shifts = jnp.zeros((6,), jnp.float32)         # beta - mean*scale == 0

    # Stacked tap weights: row 0 = 1x1 branch, rows 1 + ri*9 + i*3 + j = dilated
    # taps, row K-1 = pooling 1x1.
    rows = [w0[:, :, 0, 0]]                                          # (1, C)
    for wr in w3_list:
        rows.append(jnp.transpose(wr[0], (1, 2, 0)).reshape(9, C))   # (9, C)
    rows.append(wpool[:, :, 0, 0])                                   # (1, C)
    wall = (jnp.concatenate(rows, axis=0) * scale).astype(compute_dtype)  # (K, C)

    wproj_k = (wproj[0, :, 0, 0] * scale).astype(jnp.float32)        # (5,)

    # Dense (no padding zeros in HBM), channels-first, flat-spatial image.
    x_flat = x_nchw.reshape(N, C, S).astype(compute_dtype)
    if SP != S:
        x_flat = jnp.pad(x_flat, ((0, 0), (0, 0), (0, SP - S)))

    kernel = partial(aspp_kernel, H=H, W=W, WL=WL, pad=pad, K=K,
                     rates=tuple(rates), inv_hw=1.0 / float(S))

    out = pl.pallas_call(
        kernel,
        out_shape=jax.ShapeDtypeStruct((N, 1, Lwin), jnp.float32),
        grid=(N,),
        in_specs=[
            pl.BlockSpec(memory_space=pltpu.MemorySpace.SMEM),   # BN shifts (6,)
            pl.BlockSpec(memory_space=pltpu.MemorySpace.SMEM),   # project w (5,)
            pl.BlockSpec((1, C, SP), lambda n: (n, 0, 0)),        # image n (bf16)
            pl.BlockSpec((K, C), lambda n: (0, 0)),               # stacked taps
        ],
        out_specs=pl.BlockSpec((1, 1, Lwin), lambda n: (n, 0, 0)),
        scratch_shapes=[pltpu.VMEM((K, LSCR), jnp.float32)],      # padded taps
        compiler_params=pltpu.CompilerParams(
            dimension_semantics=("parallel",),     # image-parallel (v7x 2 TCs)
            vmem_limit_bytes=32 * 1024 * 1024),    # ample on all gens incl v7x
    )(shifts, wproj_k, x_flat, wall)

    # Layout plumbing only: drop the WL-stride padding columns, return NCHW.
    out = out.reshape(N, H, WL)[:, :, :W]
    return out[:, None, :, :]


def aspp_reference(x, w0, w3_list, wpool, wproj, rates):
    """Pure-JAX reference (NCHW), inference-mode BN / identity dropout."""
    scale = 1.0 / jnp.sqrt(1.0 + _BN_EPS)
    dn = ("NCHW", "OIHW", "NCHW")
    bnrelu = lambda y: jnp.maximum(y * scale, 0.0)

    branches = [bnrelu(lax.conv_general_dilated(x, w0, (1, 1), "VALID",
                                                dimension_numbers=dn))]
    for r, w in zip(rates, w3_list):
        y = lax.conv_general_dilated(x, w, (1, 1), [(r, r), (r, r)],
                                     rhs_dilation=(r, r), dimension_numbers=dn)
        branches.append(bnrelu(y))
    pooled = jnp.mean(x, axis=(2, 3), keepdims=True)
    y = bnrelu(lax.conv_general_dilated(pooled, wpool, (1, 1), "VALID",
                                        dimension_numbers=dn))
    branches.append(jnp.broadcast_to(y, (x.shape[0], 1, x.shape[2], x.shape[3])))
    cat = jnp.concatenate(branches, axis=1)
    out = lax.conv_general_dilated(cat, wproj, (1, 1), "VALID",
                                   dimension_numbers=dn)
    return bnrelu(out)


if __name__ == "__main__":
    key = jax.random.PRNGKey(0)
    N, C, H, W = 2, 4, 16, 16
    rates = (1, 2, 3)                 # 3 atrous rates -> 5 branches total

    kx, k0, k3, kp, kq = jax.random.split(key, 5)
    x = jax.random.normal(kx, (N, C, H, W), jnp.float32)
    w0 = jax.random.normal(k0, (1, C, 1, 1), jnp.float32) * 0.3
    w3_list = [jax.random.normal(k, (1, C, 3, 3), jnp.float32) * 0.3
               for k in jax.random.split(k3, len(rates))]
    wpool = jax.random.normal(kp, (1, C, 1, 1), jnp.float32) * 0.3
    wproj = jax.random.normal(kq, (1, 5, 1, 1), jnp.float32) * 0.3

    # The kernel feeds bf16 operands to the MXU (all generations hit peak at
    # bf16).  Quantize the reference's inputs identically so the comparison
    # isolates kernel correctness (accumulation is f32 on both sides).
    q = lambda a: a.astype(jnp.bfloat16).astype(jnp.float32)
    xq, w0q, wpq, wjq = q(x), q(w0), q(wpool), q(wproj)
    w3q = [q(w) for w in w3_list]

    out = jax.block_until_ready(aspp_pallas(xq, w0q, w3q, wpq, wjq, rates))
    ref = aspp_reference(xq, w0q, w3q, wpq, wjq, rates)

    assert out.shape == (N, 1, H, W)
    np.testing.assert_allclose(np.asarray(out), np.asarray(ref),
                               atol=1e-2, rtol=1e-2)
    print("KERNEL_OK")
</pallas_src>

<mosaic_0001>
module attributes {stable_mosaic.version = 11 : i64} {
  func.func @aspp_kernel(%arg0: i32, %arg1: memref<6xf32, #tpu.memory_space<smem>>, %arg2: memref<5xf32, #tpu.memory_space<smem>>, %arg3: memref<1x4x256xbf16, #tpu.memory_space<vmem>>, %arg4: memref<29x4xbf16, #tpu.memory_space<vmem>>, %arg5: memref<1x1x2048xf32, #tpu.memory_space<vmem>>, %arg6: memref<29x2816xf32, #tpu.memory_space<vmem>>) attributes {dimension_semantics = [#tpu.dimension_semantics<parallel>], iteration_bounds = array<i64: 2>, scalar_prefetch = 0 : i64, scratch_operands = 1 : i64, tpu.core_type = #tpu.core_type<tc>, window_params = [{transform_indices = @transform_0, window_bounds = array<i64: 6>}, {transform_indices = @transform_1, window_bounds = array<i64: 5>}, {transform_indices = @transform_2, window_bounds = array<i64: 1, 4, 256>}, {pipeline_mode = #tpu.pipeline_mode<synchronous>, transform_indices = @transform_3, window_bounds = array<i64: 29, 4>}, {transform_indices = @transform_4, window_bounds = array<i64: 1, 1, 2048>}]} {
    %cst = arith.constant 0.000000e+00 : f32
    %0 = vector.broadcast %cst : f32 to vector<29x2816xf32>
    %c0 = arith.constant 0 : index
    %c0_0 = arith.constant 0 : index
    %1 = vector.load %arg6[%c0, %c0_0] : memref<29x2816xf32, #tpu.memory_space<vmem>>, vector<29x2816xf32>
    tpu.vector_store %arg6[%c0, %c0_0], %0 {strides = array<i32>} : memref<29x2816xf32, #tpu.memory_space<vmem>>, vector<29x2816xf32>,
    %c0_1 = arith.constant 0 : index
    %c0_2 = arith.constant 0 : index
    %2 = vector.load %arg4[%c0_1, %c0_2] : memref<29x4xbf16, #tpu.memory_space<vmem>>, vector<29x4xbf16>
    %c0_3 = arith.constant 0 : index
    %c0_4 = arith.constant 0 : index
    %c0_5 = arith.constant 0 : index
    %3 = vector.load %arg3[%c0_3, %c0_4, %c0_5] : memref<1x4x256xbf16, #tpu.memory_space<vmem>>, vector<1x4x256xbf16>
    %4 = vector.shape_cast %3 : vector<1x4x256xbf16> to vector<4x256xbf16>
    %cst_6 = arith.constant dense<0.000000e+00> : vector<29x256xf32>
    %5 = tpu.matmul %2, %4, %cst_6 {dimension_numbers = #tpu.dot_dimension_numbers<[1], [0], [0], [1], [0, 0, 1, 1], [], []>} : vector<29x4xbf16>, vector<4x256xbf16>, vector<29x256xf32> -> vector<29x256xf32>
    %6 = vector.extract_strided_slice %5 {offsets = [0, 0], sizes = [29, 16], strides = [1, 1]} : vector<29x256xf32> to vector<29x16xf32>
    %c0_7 = arith.constant 0 : index
    %c384 = arith.constant 384 : index
    %7 = vector.load %arg6[%c0_7, %c384] : memref<29x2816xf32, #tpu.memory_space<vmem>>, vector<29x16xf32>
    tpu.vector_store %arg6[%c0_7, %c384], %6 {strides = array<i32>} : memref<29x2816xf32, #tpu.memory_space<vmem>>, vector<29x16xf32>,
    %8 = vector.extract_strided_slice %5 {offsets = [0, 16], sizes = [29, 16], strides = [1, 1]} : vector<29x256xf32> to vector<29x16xf32>
    %c0_8 = arith.constant 0 : index
    %c512 = arith.constant 512 : index
    %9 = vector.load %arg6[%c0_8, %c512] : memref<29x2816xf32, #tpu.memory_space<vmem>>, vector<29x16xf32>
    tpu.vector_store %arg6[%c0_8, %c512], %8 {strides = array<i32>} : memref<29x2816xf32, #tpu.memory_space<vmem>>, vector<29x16xf32>,
    %10 = vector.extract_strided_slice %5 {offsets = [0, 32], sizes = [29, 16], strides = [1, 1]} : vector<29x256xf32> to vector<29x16xf32>
    %c0_9 = arith.constant 0 : index
    %c640 = arith.constant 640 : index
    %11 = vector.load %arg6[%c0_9, %c640] : memref<29x2816xf32, #tpu.memory_space<vmem>>, vector<29x16xf32>
    tpu.vector_store %arg6[%c0_9, %c640], %10 {strides = array<i32>} : memref<29x2816xf32, #tpu.memory_space<vmem>>, vector<29x16xf32>,
    %12 = vector.extract_strided_slice %5 {offsets = [0, 48], sizes = [29, 16], strides = [1, 1]} : vector<29x256xf32> to vector<29x16xf32>
    %c0_10 = arith.constant 0 : index
    %c768 = arith.constant 768 : index
    %13 = vector.load %arg6[%c0_10, %c768] : memref<29x2816xf32, #tpu.memory_space<vmem>>, vector<29x16xf32>
    tpu.vector_store %arg6[%c0_10, %c768], %12 {strides = array<i32>} : memref<29x2816xf32, #tpu.memory_space<vmem>>, vector<29x16xf32>,
    %14 = vector.extract_strided_slice %5 {offsets = [0, 64], sizes = [29, 16], strides = [1, 1]} : vector<29x256xf32> to vector<29x16xf32>
    %c0_11 = arith.constant 0 : index
    %c896 = arith.constant 896 : index
    %15 = vector.load %arg6[%c0_11, %c896] : memref<29x2816xf32, #tpu.memory_space<vmem>>, vector<29x16xf32>
    tpu.vector_store %arg6[%c0_11, %c896], %14 {strides = array<i32>} : memref<29x2816xf32, #tpu.memory_space<vmem>>, vector<29x16xf32>,
    %16 = vector.extract_strided_slice %5 {offsets = [0, 80], sizes = [29, 16], strides = [1, 1]} : vector<29x256xf32> to vector<29x16xf32>
    %c0_12 = arith.constant 0 : index
    %c1024 = arith.constant 1024 : index
    %17 = vector.load %arg6[%c0_12, %c1024] : memref<29x2816xf32, #tpu.memory_space<vmem>>, vector<29x16xf32>
    tpu.vector_store %arg6[%c0_12, %c1024], %16 {strides = array<i32>} : memref<29x2816xf32, #tpu.memory_space<vmem>>, vector<29x16xf32>,
    %18 = vector.extract_strided_slice %5 {offsets = [0, 96], sizes = [29, 16], strides = [1, 1]} : vector<29x256xf32> to vector<29x16xf32>
    %c0_13 = arith.constant 0 : index
    %c1152 = arith.constant 1152 : index
    %19 = vector.load %arg6[%c0_13, %c1152] : memref<29x2816xf32, #tpu.memory_space<vmem>>, vector<29x16xf32>
    tpu.vector_store %arg6[%c0_13, %c1152], %18 {strides = array<i32>} : memref<29x2816xf32, #tpu.memory_space<vmem>>, vector<29x16xf32>,
    %20 = vector.extract_strided_slice %5 {offsets = [0, 112], sizes = [29, 16], strides = [1, 1]} : vector<29x256xf32> to vector<29x16xf32>
    %c0_14 = arith.constant 0 : index
    %c1280 = arith.constant 1280 : index
    %21 = vector.load %arg6[%c0_14, %c1280] : memref<29x2816xf32, #tpu.memory_space<vmem>>, vector<29x16xf32>
    tpu.vector_store %arg6[%c0_14, %c1280], %20 {strides = array<i32>} : memref<29x2816xf32, #tpu.memory_space<vmem>>, vector<29x16xf32>,
    %22 = vector.extract_strided_slice %5 {offsets = [0, 128], sizes = [29, 16], strides = [1, 1]} : vector<29x256xf32> to vector<29x16xf32>
    %c0_15 = arith.constant 0 : index
    %c1408 = arith.constant 1408 : index
    %23 = vector.load %arg6[%c0_15, %c1408] : memref<29x2816xf32, #tpu.memory_space<vmem>>, vector<29x16xf32>
    tpu.vector_store %arg6[%c0_15, %c1408], %22 {strides = array<i32>} : memref<29x2816xf32, #tpu.memory_space<vmem>>, vector<29x16xf32>,
    %24 = vector.extract_strided_slice %5 {offsets = [0, 144], sizes = [29, 16], strides = [1, 1]} : vector<29x256xf32> to vector<29x16xf32>
    %c0_16 = arith.constant 0 : index
    %c1536 = arith.constant 1536 : index
    %25 = vector.load %arg6[%c0_16, %c1536] : memref<29x2816xf32, #tpu.memory_space<vmem>>, vector<29x16xf32>
    tpu.vector_store %arg6[%c0_16, %c1536], %24 {strides = array<i32>} : memref<29x2816xf32, #tpu.memory_space<vmem>>, vector<29x16xf32>,
    %26 = vector.extract_strided_slice %5 {offsets = [0, 160], sizes = [29, 16], strides = [1, 1]} : vector<29x256xf32> to vector<29x16xf32>
    %c0_17 = arith.constant 0 : index
    %c1664 = arith.constant 1664 : index
    %27 = vector.load %arg6[%c0_17, %c1664] : memref<29x2816xf32, #tpu.memory_space<vmem>>, vector<29x16xf32>
    tpu.vector_store %arg6[%c0_17, %c1664], %26 {strides = array<i32>} : memref<29x2816xf32, #tpu.memory_space<vmem>>, vector<29x16xf32>,
    %28 = vector.extract_strided_slice %5 {offsets = [0, 176], sizes = [29, 16], strides = [1, 1]} : vector<29x256xf32> to vector<29x16xf32>
    %c0_18 = arith.constant 0 : index
    %c1792 = arith.constant 1792 : index
    %29 = vector.load %arg6[%c0_18, %c1792] : memref<29x2816xf32, #tpu.memory_space<vmem>>, vector<29x16xf32>
    tpu.vector_store %arg6[%c0_18, %c1792], %28 {strides = array<i32>} : memref<29x2816xf32, #tpu.memory_space<vmem>>, vector<29x16xf32>,
    %30 = vector.extract_strided_slice %5 {offsets = [0, 192], sizes = [29, 16], strides = [1, 1]} : vector<29x256xf32> to vector<29x16xf32>
    %c0_19 = arith.constant 0 : index
    %c1920 = arith.constant 1920 : index
    %31 = vector.load %arg6[%c0_19, %c1920] : memref<29x2816xf32, #tpu.memory_space<vmem>>, vector<29x16xf32>
    tpu.vector_store %arg6[%c0_19, %c1920], %30 {strides = array<i32>} : memref<29x2816xf32, #tpu.memory_space<vmem>>, vector<29x16xf32>,
    %32 = vector.extract_strided_slice %5 {offsets = [0, 208], sizes = [29, 16], strides = [1, 1]} : vector<29x256xf32> to vector<29x16xf32>
    %c0_20 = arith.constant 0 : index
    %c2048 = arith.constant 2048 : index
    %33 = vector.load %arg6[%c0_20, %c2048] : memref<29x2816xf32, #tpu.memory_space<vmem>>, vector<29x16xf32>
    tpu.vector_store %arg6[%c0_20, %c2048], %32 {strides = array<i32>} : memref<29x2816xf32, #tpu.memory_space<vmem>>, vector<29x16xf32>,
    %34 = vector.extract_strided_slice %5 {offsets = [0, 224], sizes = [29, 16], strides = [1, 1]} : vector<29x256xf32> to vector<29x16xf32>
    %c0_21 = arith.constant 0 : index
    %c2176 = arith.constant 2176 : index
    %35 = vector.load %arg6[%c0_21, %c2176] : memref<29x2816xf32, #tpu.memory_space<vmem>>, vector<29x16xf32>
    tpu.vector_store %arg6[%c0_21, %c2176], %34 {strides = array<i32>} : memref<29x2816xf32, #tpu.memory_space<vmem>>, vector<29x16xf32>,
    %36 = vector.extract_strided_slice %5 {offsets = [0, 240], sizes = [29, 16], strides = [1, 1]} : vector<29x256xf32> to vector<29x16xf32>
    %c0_22 = arith.constant 0 : index
    %c2304 = arith.constant 2304 : index
    %37 = vector.load %arg6[%c0_22, %c2304] : memref<29x2816xf32, #tpu.memory_space<vmem>>, vector<29x16xf32>
    tpu.vector_store %arg6[%c0_22, %c2304], %36 {strides = array<i32>} : memref<29x2816xf32, #tpu.memory_space<vmem>>, vector<29x16xf32>,
    %c0_23 = arith.constant 0 : index
    %38 = memref.load %arg2[%c0_23] : memref<5xf32, #tpu.memory_space<smem>>
    %c0_24 = arith.constant 0 : index
    %c384_25 = arith.constant 384 : index
    %39 = vector.load %arg6[%c0_24, %c384_25] : memref<29x2816xf32, #tpu.memory_space<vmem>>, vector<1x2048xf32>
    %c0_26 = arith.constant 0 : index
    %40 = memref.load %arg1[%c0_26] : memref<6xf32, #tpu.memory_space<smem>>
    %41 = vector.broadcast %40 : f32 to vector<1x2048xf32>
    %42 = arith.addf %39, %41 : vector<1x2048xf32>
    %cst_27 = arith.constant 0.000000e+00 : f32
    %43 = vector.broadcast %cst_27 : f32 to vector<1x2048xf32>
    %44 = arith.maximumf %42, %43 : vector<1x2048xf32>
    %45 = vector.broadcast %38 : f32 to vector<1x2048xf32>
    %46 = arith.mulf %45, %44 : vector<1x2048xf32>
    %c1 = arith.constant 1 : index
    %c256 = arith.constant 256 : index
    %47 = vector.load %arg6[%c1, %c256] : memref<29x2816xf32, #tpu.memory_space<vmem>>, vector<1x2048xf32>
    %c4 = arith.constant 4 : index
    %c384_28 = arith.constant 384 : index
    %48 = vector.load %arg6[%c4, %c384_28] : memref<29x2816xf32, #tpu.memory_space<vmem>>, vector<1x2048xf32>
    %49 = arith.addf %47, %48 : vector<1x2048xf32>
    %c7 = arith.constant 7 : index
    %c512_29 = arith.constant 512 : index
    %50 = vector.load %arg6[%c7, %c512_29] : memref<29x2816xf32, #tpu.memory_space<vmem>>, vector<1x2048xf32>
    %51 = arith.addf %49, %50 : vector<1x2048xf32>
    %cst_30 = arith.constant 0.000000e+00 : f32
    %52 = vector.broadcast %cst_30 : f32 to vector<1x1xf32>
    %53 = vector.extract_strided_slice %51 {offsets = [0, 0], sizes = [1, 2047], strides = [1, 1]} : vector<1x2048xf32> to vector<1x2047xf32>
    %54 = tpu.concatenate %52, %53 in 1 : vector<1x1xf32>, vector<1x2047xf32> -> vector<1x2048xf32>
    %c2 = arith.constant 2 : index
    %c256_31 = arith.constant 256 : index
    %55 = vector.load %arg6[%c2, %c256_31] : memref<29x2816xf32, #tpu.memory_space<vmem>>, vector<1x2048xf32>
    %c5 = arith.constant 5 : index
    %c384_32 = arith.constant 384 : index
    %56 = vector.load %arg6[%c5, %c384_32] : memref<29x2816xf32, #tpu.memory_space<vmem>>, vector<1x2048xf32>
    %57 = arith.addf %55, %56 : vector<1x2048xf32>
    %c8 = arith.constant 8 : index
    %c512_33 = arith.constant 512 : index
    %58 = vector.load %arg6[%c8, %c512_33] : memref<29x2816xf32, #tpu.memory_space<vmem>>, vector<1x2048xf32>
    %59 = arith.addf %57, %58 : vector<1x2048xf32>
    %60 = arith.addf %54, %59 : vector<1x2048xf32>
    %c3 = arith.constant 3 : index
    %c256_34 = arith.constant 256 : index
    %61 = vector.load %arg6[%c3, %c256_34] : memref<29x2816xf32, #tpu.memory_space<vmem>>, vector<1x2048xf32>
    %c6 = arith.constant 6 : index
    %c384_35 = arith.constant 384 : index
    %62 = vector.load %arg6[%c6, %c384_35] : memref<29x2816xf32, #tpu.memory_space<vmem>>, vector<1x2048xf32>
    %63 = arith.addf %61, %62 : vector<1x2048xf32>
    %c9 = arith.constant 9 : index
    %c512_36 = arith.constant 512 : index
    %64 = vector.load %arg6[%c9, %c512_36] : memref<29x2816xf32, #tpu.memory_space<vmem>>, vector<1x2048xf32>
    %65 = arith.addf %63, %64 : vector<1x2048xf32>
    %66 = vector.extract_strided_slice %65 {offsets = [0, 1], sizes = [1, 2047], strides = [1, 1]} : vector<1x2048xf32> to vector<1x2047xf32>
    %cst_37 = arith.constant 0.000000e+00 : f32
    %67 = vector.broadcast %cst_37 : f32 to vector<1x1xf32>
    %68 = tpu.concatenate %66, %67 in 1 : vector<1x2047xf32>, vector<1x1xf32> -> vector<1x2048xf32>
    %69 = arith.addf %60, %68 : vector<1x2048xf32>
    %c1_38 = arith.constant 1 : index
    %70 = memref.load %arg2[%c1_38] : memref<5xf32, #tpu.memory_space<smem>>
    %c1_39 = arith.constant 1 : index
    %71 = memref.load %arg1[%c1_39] : memref<6xf32, #tpu.memory_space<smem>>
    %72 = vector.broadcast %71 : f32 to vector<1x2048xf32>
    %73 = arith.addf %69, %72 : vector<1x2048xf32>
    %cst_40 = arith.constant 0.000000e+00 : f32
    %74 = vector.broadcast %cst_40 : f32 to vector<1x2048xf32>
    %75 = arith.maximumf %73, %74 : vector<1x2048xf32>
    %76 = vector.broadcast %70 : f32 to vector<1x2048xf32>
    %77 = arith.mulf %76, %75 : vector<1x2048xf32>
    %78 = arith.addf %46, %77 : vector<1x2048xf32>
    %c10 = arith.constant 10 : index
    %c128 = arith.constant 128 : index
    %79 = vector.load %arg6[%c10, %c128] : memref<29x2816xf32, #tpu.memory_space<vmem>>, vector<1x2048xf32>
    %c13 = arith.constant 13 : index
    %c384_41 = arith.constant 384 : index
    %80 = vector.load %arg6[%c13, %c384_41] : memref<29x2816xf32, #tpu.memory_space<vmem>>, vector<1x2048xf32>
    %81 = arith.addf %79, %80 : vector<1x2048xf32>
    %c16 = arith.constant 16 : index
    %c640_42 = arith.constant 640 : index
    %82 = vector.load %arg6[%c16, %c640_42] : memref<29x2816xf32, #tpu.memory_space<vmem>>, vector<1x2048xf32>
    %83 = arith.addf %81, %82 : vector<1x2048xf32>
    %cst_43 = arith.constant 0.000000e+00 : f32
    %84 = vector.broadcast %cst_43 : f32 to vector<1x2xf32>
    %85 = vector.extract_strided_slice %83 {offsets = [0, 0], sizes = [1, 2046], strides = [1, 1]} : vector<1x2048xf32> to vector<1x2046xf32>
    %86 = tpu.concatenate %84, %85 in 1 : vector<1x2xf32>, vector<1x2046xf32> -> vector<1x2048xf32>
    %c11 = arith.constant 11 : index
    %c128_44 = arith.constant 128 : index
    %87 = vector.load %arg6[%c11, %c128_44] : memref<29x2816xf32, #tpu.memory_space<vmem>>, vector<1x2048xf32>
    %c14 = arith.constant 14 : index
    %c384_45 = arith.constant 384 : index
    %88 = vector.load %arg6[%c14, %c384_45] : memref<29x2816xf32, #tpu.memory_space<vmem>>, vector<1x2048xf32>
    %89 = arith.addf %87, %88 : vector<1x2048xf32>
    %c17 = arith.constant 17 : index
    %c640_46 = arith.constant 640 : index
    %90 = vector.load %arg6[%c17, %c640_46] : memref<29x2816xf32, #tpu.memory_space<vmem>>, vector<1x2048xf32>
    %91 = arith.addf %89, %90 : vector<1x2048xf32>
    %92 = arith.addf %86, %91 : vector<1x2048xf32>
    %c12 = arith.constant 12 : index
    %c128_47 = arith.constant 128 : index
    %93 = vector.load %arg6[%c12, %c128_47] : memref<29x2816xf32, #tpu.memory_space<vmem>>, vector<1x2048xf32>
    %c15 = arith.constant 15 : index
    %c384_48 = arith.constant 384 : index
    %94 = vector.load %arg6[%c15, %c384_48] : memref<29x2816xf32, #tpu.memory_space<vmem>>, vector<1x2048xf32>
    %95 = arith.addf %93, %94 : vector<1x2048xf32>
    %c18 = arith.constant 18 : index
    %c640_49 = arith.constant 640 : index
    %96 = vector.load %arg6[%c18, %c640_49] : memref<29x2816xf32, #tpu.memory_space<vmem>>, vector<1x2048xf32>
    %97 = arith.addf %95, %96 : vector<1x2048xf32>
    %98 = vector.extract_strided_slice %97 {offsets = [0, 2], sizes = [1, 2046], strides = [1, 1]} : vector<1x2048xf32> to vector<1x2046xf32>
    %cst_50 = arith.constant 0.000000e+00 : f32
    %99 = vector.broadcast %cst_50 : f32 to vector<1x2xf32>
    %100 = tpu.concatenate %98, %99 in 1 : vector<1x2046xf32>, vector<1x2xf32> -> vector<1x2048xf32>
    %101 = arith.addf %92, %100 : vector<1x2048xf32>
    %c2_51 = arith.constant 2 : index
    %102 = memref.load %arg2[%c2_51] : memref<5xf32, #tpu.memory_space<smem>>
    %c2_52 = arith.constant 2 : index
    %103 = memref.load %arg1[%c2_52] : memref<6xf32, #tpu.memory_space<smem>>
    %104 = vector.broadcast %103 : f32 to vector<1x2048xf32>
    %105 = arith.addf %101, %104 : vector<1x2048xf32>
    %cst_53 = arith.constant 0.000000e+00 : f32
    %106 = vector.broadcast %cst_53 : f32 to vector<1x2048xf32>
    %107 = arith.maximumf %105, %106 : vector<1x2048xf32>
    %108 = vector.broadcast %102 : f32 to vector<1x2048xf32>
    %109 = arith.mulf %108, %107 : vector<1x2048xf32>
    %110 = arith.addf %78, %109 : vector<1x2048xf32>
    %c19 = arith.constant 19 : index
    %c0_54 = arith.constant 0 : index
    %111 = vector.load %arg6[%c19, %c0_54] : memref<29x2816xf32, #tpu.memory_space<vmem>>, vector<1x2048xf32>
    %c22 = arith.constant 22 : index
    %c384_55 = arith.constant 384 : index
    %112 = vector.load %arg6[%c22, %c384_55] : memref<29x2816xf32, #tpu.memory_space<vmem>>, vector<1x2048xf32>
    %113 = arith.addf %111, %112 : vector<1x2048xf32>
    %c25 = arith.constant 25 : index
    %c768_56 = arith.constant 768 : index
    %114 = vector.load %arg6[%c25, %c768_56] : memref<29x2816xf32, #tpu.memory_space<vmem>>, vector<1x2048xf32>
    %115 = arith.addf %113, %114 : vector<1x2048xf32>
    %cst_57 = arith.constant 0.000000e+00 : f32
    %116 = vector.broadcast %cst_57 : f32 to vector<1x3xf32>
    %117 = vector.extract_strided_slice %115 {offsets = [0, 0], sizes = [1, 2045], strides = [1, 1]} : vector<1x2048xf32> to vector<1x2045xf32>
    %118 = tpu.concatenate %116, %117 in 1 : vector<1x3xf32>, vector<1x2045xf32> -> vector<1x2048xf32>
    %c20 = arith.constant 20 : index
    %c0_58 = arith.constant 0 : index
    %119 = vector.load %arg6[%c20, %c0_58] : memref<29x2816xf32, #tpu.memory_space<vmem>>, vector<1x2048xf32>
    %c23 = arith.constant 23 : index
    %c384_59 = arith.constant 384 : index
    %120 = vector.load %arg6[%c23, %c384_59] : memref<29x2816xf32, #tpu.memory_space<vmem>>, vector<1x2048xf32>
    %121 = arith.addf %119, %120 : vector<1x2048xf32>
    %c26 = arith.constant 26 : index
    %c768_60 = arith.constant 768 : index
    %122 = vector.load %arg6[%c26, %c768_60] : memref<29x2816xf32, #tpu.memory_space<vmem>>, vector<1x2048xf32>
    %123 = arith.addf %121, %122 : vector<1x2048xf32>
    %124 = arith.addf %118, %123 : vector<1x2048xf32>
    %c21 = arith.constant 21 : index
    %c0_61 = arith.constant 0 : index
    %125 = vector.load %arg6[%c21, %c0_61] : memref<29x2816xf32, #tpu.memory_space<vmem>>, vector<1x2048xf32>
    %c24 = arith.constant 24 : index
    %c384_62 = arith.constant 384 : index
    %126 = vector.load %arg6[%c24, %c384_62] : memref<29x2816xf32, #tpu.memory_space<vmem>>, vector<1x2048xf32>
    %127 = arith.addf %125, %126 : vector<1x2048xf32>
    %c27 = arith.constant 27 : index
    %c768_63 = arith.constant 768 : index
    %128 = vector.load %arg6[%c27, %c768_63] : memref<29x2816xf32, #tpu.memory_space<vmem>>, vector<1x2048xf32>
    %129 = arith.addf %127, %128 : vector<1x2048xf32>
    %130 = vector.extract_strided_slice %129 {offsets = [0, 3], sizes = [1, 2045], strides = [1, 1]} : vector<1x2048xf32> to vector<1x2045xf32>
    %cst_64 = arith.constant 0.000000e+00 : f32
    %131 = vector.broadcast %cst_64 : f32 to vector<1x3xf32>
    %132 = tpu.concatenate %130, %131 in 1 : vector<1x2045xf32>, vector<1x3xf32> -> vector<1x2048xf32>
    %133 = arith.addf %124, %132 : vector<1x2048xf32>
    %c3_65 = arith.constant 3 : index
    %134 = memref.load %arg2[%c3_65] : memref<5xf32, #tpu.memory_space<smem>>
    %c3_66 = arith.constant 3 : index
    %135 = memref.load %arg1[%c3_66] : memref<6xf32, #tpu.memory_space<smem>>
    %136 = vector.broadcast %135 : f32 to vector<1x2048xf32>
    %137 = arith.addf %133, %136 : vector<1x2048xf32>
    %cst_67 = arith.constant 0.000000e+00 : f32
    %138 = vector.broadcast %cst_67 : f32 to vector<1x2048xf32>
    %139 = arith.maximumf %137, %138 : vector<1x2048xf32>
    %140 = vector.broadcast %134 : f32 to vector<1x2048xf32>
    %141 = arith.mulf %140, %139 : vector<1x2048xf32>
    %142 = arith.addf %110, %141 : vector<1x2048xf32>
    %c28 = arith.constant 28 : index
    %c0_68 = arith.constant 0 : index
    %143 = vector.load %arg6[%c28, %c0_68] : memref<29x2816xf32, #tpu.memory_space<vmem>>, vector<1x2816xf32>
    %144 = vector.shape_cast %143 : vector<1x2816xf32> to vector<1x1x2816xf32>
    %cst_69 = arith.constant dense<0.000000e+00> : vector<1xf32>
    %145 = vector.multi_reduction <add>, %144, %cst_69 [1, 2] : vector<1x1x2816xf32> to vector<1xf32>
    %146 = vector.shape_cast %145 : vector<1xf32> to vector<1x1x1xf32>
    %147 = vector.extract %146[0, 0, 0] : f32 from vector<1x1x1xf32>
    %cst_70 = arith.constant 3.906250e-03 : f32
    %148 = arith.mulf %147, %cst_70 : f32
    %c4_71 = arith.constant 4 : index
    %149 = memref.load %arg1[%c4_71] : memref<6xf32, #tpu.memory_space<smem>>
    %150 = arith.addf %148, %149 : f32
    %cst_72 = arith.constant 0.000000e+00 : f32
    %151 = arith.maximumf %150, %cst_72 : f32
    %c4_73 = arith.constant 4 : index
    %152 = memref.load %arg2[%c4_73] : memref<5xf32, #tpu.memory_space<smem>>
    %153 = arith.mulf %152, %151 : f32
    %154 = vector.broadcast %153 : f32 to vector<1x2048xf32>
    %155 = arith.addf %142, %154 : vector<1x2048xf32>
    %c5_74 = arith.constant 5 : index
    %156 = memref.load %arg1[%c5_74] : memref<6xf32, #tpu.memory_space<smem>>
    %157 = vector.broadcast %156 : f32 to vector<1x2048xf32>
    %158 = arith.addf %155, %157 : vector<1x2048xf32>
    %cst_75 = arith.constant 0.000000e+00 : f32
    %159 = vector.broadcast %cst_75 : f32 to vector<1x2048xf32>
    %160 = arith.maximumf %158, %159 : vector<1x2048xf32>
    %161 = vector.shape_cast %160 : vector<1x2048xf32> to vector<1x1x2048xf32>
    %c0_76 = arith.constant 0 : index
    %c0_77 = arith.constant 0 : index
    %c0_78 = arith.constant 0 : index
    %162 = vector.load %arg5[%c0_76, %c0_77, %c0_78] : memref<1x1x2048xf32, #tpu.memory_space<vmem>>, vector<1x1x2048xf32>
    tpu.vector_store %arg5[%c0_76, %c0_77, %c0_78], %161 {strides = array<i32>} : memref<1x1x2048xf32, #tpu.memory_space<vmem>>, vector<1x1x2048xf32>,
    return
  }
  func.func @transform_0(%arg0: i32) -> i32 {
    %c0_i32 = arith.constant 0 : i32
    %c0_i32_0 = arith.constant 0 : i32
    return %c0_i32 : i32
  }
  func.func @transform_1(%arg0: i32) -> i32 {
    %c0_i32 = arith.constant 0 : i32
    %c0_i32_0 = arith.constant 0 : i32
    return %c0_i32 : i32
  }
  func.func @transform_2(%arg0: i32) -> (i32, i32, i32) {
    %c0_i32 = arith.constant 0 : i32
    %c0_i32_0 = arith.constant 0 : i32
    %c0_i32_1 = arith.constant 0 : i32
    return %arg0, %c0_i32, %c0_i32_0 : i32, i32, i32
  }
  func.func @transform_3(%arg0: i32) -> (i32, i32) {
    %c0_i32 = arith.constant 0 : i32
    %c0_i32_0 = arith.constant 0 : i32
    %c0_i32_1 = arith.constant 0 : i32
    return %c0_i32, %c0_i32_0 : i32, i32
  }
  func.func @transform_4(%arg0: i32) -> (i32, i32, i32) {
    %c0_i32 = arith.constant 0 : i32
    %c0_i32_0 = arith.constant 0 : i32
    %c0_i32_1 = arith.constant 0 : i32
    return %arg0, %c0_i32, %c0_i32_0 : i32, i32, i32
  }
}

</mosaic_0001>

<llo_original>
// kernel: tpu_custom_call.1
$region0: #{tpu_custom_call.1}
  #allocation0 [shape = 'u32[]', space=smem, size = 0x4, offset = 0x4, fixed_abs, tag = 'smem constant byte address 0x4 - core index']
  #allocation1 [shape = 'u32[144,128]{1,0:T(1,128)}', space=vmem, size = 0x12000, scoped, tag = 'internal scratch']
  #allocation2 [shape = 'f32[29,2816]{1,0:T(8,128)}', space=vmem, size = 0x58000, scoped, tag = 'scratch operand']
  %s0 = inlined_call_operand.vmem [shape: f32[6], index: 0, kind: input, shape index: {}]
  %s1 = inlined_call_operand.vmem [shape: f32[5], index: 1, kind: input, shape index: {}]
  %s2 = inlined_call_operand.vmem [shape: bf16[2,4,256], index: 2, kind: input, shape index: {}]
  %s3 = inlined_call_operand.vmem [shape: bf16[29,4], index: 3, kind: input, shape index: {}]
  %s4 = inlined_call_operand.hbm [shape: f32[2,1,2048], index: 4, kind: output, shape index: {}]
  %s5 = sld [smem:[#allocation0]]
  $region57: #{tpu_custom_call.1} parent=0
    _
  %s7 = ssub.s32 1, %s5
  %s8 = scalar_select 0, %s7, %s5
  $region1: #{tpu_custom_call.1} parent=0
    #allocation3 [shape = 'u8[512]{0}', space=smem, size = 0x200, scoped, tag = 'input window, operand 0, single buffered']
    #allocation4 [shape = 's32[2]{0}', space=sflag, size = 0x8, scoped, tag = 'scoped memory for tpu_custom_call.1']
    #allocation5 [shape = 's32[2]{0}', space=sflag, size = 0x8, scoped, tag = 'scoped memory for tpu_custom_call.1']
    #allocation6 [shape = 'u8[512]{0}', space=smem, size = 0x200, scoped, tag = 'input window, operand 1, single buffered']
    #allocation7 [shape = 's32[1]{0}', space=sflag, size = 0x4, scoped, tag = 'scoped memory for tpu_custom_call.1']
    #allocation8 [shape = 'u8[16384]{0}', space=vmem, size = 0x4000, scoped, tag = 'output window, operand 0']
    %9 = vsyncpa [#allocation5], 0
    %10 = vsyncpa [#allocation7], 0
    %11 = vsyncpa [#allocation4], 0
    %s12 = scalar_lea.sflag [#allocation4], 1
    %13 = vsyncpa %s12, 0
    loop: start=0, step=1, limit=4
    $region2: #{tpu_custom_call.1} parent=1 // loop_pre_header
      _
    $region3: #{tpu_custom_call.1} parent=1 // loop_header
      %s15 = sphi 0, %s19
      %p16 = scmp.ge.s32.totalorder %s15, 4
      %s23 = sphi 0, %s23
      %s25 = sphi 0, %s23
      %s26 = sphi 0, %s25
      %s40 = sphi 0, %s26
      %s44 = sphi 0, %s44
      %s46 = sphi 0, %s44
      %s47 = sphi 0, %s46
      %s61 = sphi 0, %s47
      %s67 = sphi 0, %s69
      %s70 = sphi 0, %s67
      %s71 = sphi 0, %s70
      %s87 = sphi 0, %s71
      %s91 = sphi 0, %s91
      %s93 = sphi 0, %s91
      %s94 = sphi 0, %s93
      %s108 = sphi 0, %s94
      %s114 = sphi 0, %s116
      %s117 = sphi 0, %s114
      %s118 = sphi 0, %s117
      %s134 = sphi 0, %s118
    $region4: #{tpu_custom_call.1} parent=1 // loop_header_branch
      %18 = sbr.rel (%p16) target = $region8
    $region5: #{tpu_custom_call.1} parent=1 // loop_body
      %s20 = ssub.s32 %s15, 1
      %s21 = ssub.s32 %s15, 2
      %s22 = sadd.s32 %s15, 1
      %s24 = sadd.s32 %s23, 1
      %p27 = scmp.eq.s32.totalorder %s15, 1
      %p28 = scmp.ne.s32.totalorder %s23, %s25
      %p29 = scmp.eq.s32.totalorder %s15, 0
      %p30 = por %p28, %p29
      %p31 = scmp.ne.s32.totalorder %s23, %s25
      %p32 = scmp.eq.s32.totalorder %s20, 1
      %p33 = por %p31, %p32
      %p34 = scmp.ne.s32.totalorder %s25, %s26
      %p35 = scmp.eq.s32.totalorder %s20, 0
      %p36 = por %p34, %p35
      %p37 = scmp.ne.s32.totalorder %s25, %s26
      %p38 = scmp.eq.s32.totalorder %s21, 1
      %p39 = por %p37, %p38
      %p41 = scmp.ne.s32.totalorder %s26, %s40
      %p42 = scmp.eq.s32.totalorder %s21, 0
      %p43 = por %p41, %p42
      %s45 = sadd.s32 %s44, 1
      %p48 = scmp.eq.s32.totalorder %s15, 1
      %p49 = scmp.ne.s32.totalorder %s44, %s46
      %p50 = scmp.eq.s32.totalorder %s15, 0
      %p51 = por %p49, %p50
      %p52 = scmp.ne.s32.totalorder %s44, %s46
      %p53 = scmp.eq.s32.totalorder %s20, 1
      %p54 = por %p52, %p53
      %p55 = scmp.ne.s32.totalorder %s46, %s47
      %p56 = scmp.eq.s32.totalorder %s20, 0
      %p57 = por %p55, %p56
      %p58 = scmp.ne.s32.totalorder %s46, %s47
      %p59 = scmp.eq.s32.totalorder %s21, 1
      %p60 = por %p58, %p59
      %p62 = scmp.ne.s32.totalorder %s47, %s61
      %p63 = scmp.eq.s32.totalorder %s21, 0
      %p64 = por %p62, %p63
      %s65 = ssub.s32 %s15, %s22
      %p66 = scmp.eq.s32.totalorder %s65, 0
      %s68 = sadd.s32 %s67, 1
      %s69 = scalar_select %p66, %s67, %s68
      %p72 = pneg %p66
      %p73 = scmp.eq.s32.totalorder %s15, 1
      %p74 = por %p72, %p73
      %p75 = scmp.ne.s32.totalorder %s67, %s70
      %p76 = scmp.eq.s32.totalorder %s15, 0
      %p77 = por %p75, %p76
      %p78 = scmp.ne.s32.totalorder %s67, %s70
      %p79 = scmp.eq.s32.totalorder %s20, 1
      %p80 = por %p78, %p79
      %p81 = scmp.ne.s32.totalorder %s70, %s71
      %p82 = scmp.eq.s32.totalorder %s20, 0
      %p83 = por %p81, %p82
      %p84 = scmp.ne.s32.totalorder %s70, %s71
      %p85 = scmp.eq.s32.totalorder %s21, 1
      %p86 = por %p84, %p85
      %p88 = scmp.ne.s32.totalorder %s71, %s87
      %p89 = scmp.eq.s32.totalorder %s21, 0
      %p90 = por %p88, %p89
      %s92 = sadd.s32 %s91, 1
      %p95 = scmp.eq.s32.totalorder %s15, 1
      %p96 = scmp.ne.s32.totalorder %s91, %s93
      %p97 = scmp.eq.s32.totalorder %s15, 0
      %p98 = por %p96, %p97
      %p99 = scmp.ne.s32.totalorder %s91, %s93
      %p100 = scmp.eq.s32.totalorder %s20, 1
      %p101 = por %p99, %p100
      %p102 = scmp.ne.s32.totalorder %s93, %s94
      %p103 = scmp.eq.s32.totalorder %s20, 0
      %p104 = por %p102, %p103
      %p105 = scmp.ne.s32.totalorder %s93, %s94
      %p106 = scmp.eq.s32.totalorder %s21, 1
      %p107 = por %p105, %p106
      %p109 = scmp.ne.s32.totalorder %s94, %s108
      %p110 = scmp.eq.s32.totalorder %s21, 0
      %p111 = por %p109, %p110
      %s112 = ssub.s32 %s15, %s22
      %p113 = scmp.eq.s32.totalorder %s112, 0
      %s115 = sadd.s32 %s114, 1
      %s116 = scalar_select %p113, %s114, %s115
      %p119 = pneg %p113
      %p120 = scmp.eq.s32.totalorder %s15, 1
      %p121 = por %p119, %p120
      %p122 = scmp.ne.s32.totalorder %s114, %s117
      %p123 = scmp.eq.s32.totalorder %s15, 0
      %p124 = por %p122, %p123
      %p125 = scmp.ne.s32.totalorder %s114, %s117
      %p126 = scmp.eq.s32.totalorder %s20, 1
      %p127 = por %p125, %p126
      %p128 = scmp.ne.s32.totalorder %s117, %s118
      %p129 = scmp.eq.s32.totalorder %s20, 0
      %p130 = por %p128, %p129
      %p131 = scmp.ne.s32.totalorder %s117, %s118
      %p132 = scmp.eq.s32.totalorder %s21, 1
      %p133 = por %p131, %p132
      %p135 = scmp.ne.s32.totalorder %s118, %s134
      %p136 = scmp.eq.s32.totalorder %s21, 0
      %p137 = por %p135, %p136
      %p138 = scmp.le.s32.totalorder 1, %s15
      %p139 = scmp.lt.s32.totalorder %s15, 3
      %p140 = pnand %p138, %p139
      %p141 = pneg %p140
      // Predicated region
      $region9: #{tpu_custom_call.1} parent=5 // pred_check
        _
      $region10: #{tpu_custom_call.1} parent=5 // pred_check_branch
        %143 = sbr.rel (%p140) target = $region12
      $region11: #{tpu_custom_call.1} parent=5 // pred_region
        %s144 = ssub.s32 %s15, 1
        // Predicated region
        $region13: #{tpu_custom_call.1} parent=11 // pred_check
          %p145 = pneg %p36
        $region14: #{tpu_custom_call.1} parent=11 // pred_check_branch
          %147 = sbr.rel (%p145) target = $region16
        $region15: #{tpu_custom_call.1} parent=11 // pred_region
          %s149 = ssub.s32 16, 16
          %150 = vsyncadd [#allocation5], %s149
          %s152 = sshll.u32 %s0, 4
          %s153 = int_to_ptr.vmem [resolvable:$true] %s152
          %155 = dma.vmem_to_smem %s153, 16, [#allocation3], [#allocation5]
        $region16: #{tpu_custom_call.1} parent=11 // pred_fallthru
          _
        // Predicated region
        $region17: #{tpu_custom_call.1} parent=11 // pred_check
          %p156 = pneg %p57
        $region18: #{tpu_custom_call.1} parent=11 // pred_check_branch
          %158 = sbr.rel (%p156) target = $region20
        $region19: #{tpu_custom_call.1} parent=11 // pred_region
          %s160 = ssub.s32 16, 16
          %161 = vsyncadd [#allocation7], %s160
          %s163 = sshll.u32 %s1, 4
          %s164 = int_to_ptr.vmem [resolvable:$true] %s163
          %166 = dma.vmem_to_smem %s164, 16, [#allocation6], [#allocation7]
        $region20: #{tpu_custom_call.1} parent=11 // pred_fallthru
          _
        // Predicated region
        $region21: #{tpu_custom_call.1} parent=11 // pred_check
          %p167 = pneg %p104
        $region22: #{tpu_custom_call.1} parent=11 // pred_check_branch
          %169 = sbr.rel (%p167) target = $region24
        $region23: #{tpu_custom_call.1} parent=11 // pred_region
          _
        $region24: #{tpu_custom_call.1} parent=11 // pred_fallthru
          _
      $region12: #{tpu_custom_call.1} parent=5 // pred_fallthru
        _
      %p170 = scmp.lt.s32.totalorder %s15, 2
      // Predicated region
      $region25: #{tpu_custom_call.1} parent=5 // pred_check
        %p171 = pneg %p170
      $region26: #{tpu_custom_call.1} parent=5 // pred_check_branch
        %173 = sbr.rel (%p171) target = $region28
      $region27: #{tpu_custom_call.1} parent=5 // pred_region
        // Predicated region
        $region29: #{tpu_custom_call.1} parent=27 // pred_check
          %p174 = pneg %p77
        $region30: #{tpu_custom_call.1} parent=27 // pred_check_branch
          %176 = sbr.rel (%p174) target = $region32
        $region31: #{tpu_custom_call.1} parent=27 // pred_region
          %p177 = scmp.lt.s32.totalorder %s15, 1
          %s178 = scalar_select %p177, %s15, 1
          %s179 = smul.addr %s178, 2
          %s180 = smul.addr %s179, 2
          %s181 = scalar_lea.vmem %s2, %s180
        $region32: #{tpu_custom_call.1} parent=27 // pred_fallthru
          _
      $region28: #{tpu_custom_call.1} parent=5 // pred_fallthru
        _
      %p182 = scmp.le.s32.totalorder 1, %s15
      %p183 = scmp.lt.s32.totalorder %s15, 3
      %p184 = pnand %p182, %p183
      %p185 = pneg %p184
      // Predicated region
      $region33: #{tpu_custom_call.1} parent=5 // pred_check
        _
      $region34: #{tpu_custom_call.1} parent=5 // pred_check_branch
        %187 = sbr.rel (%p184) target = $region36
      $region35: #{tpu_custom_call.1} parent=5 // pred_region
        %s188 = ssub.s32 %s15, 1
        // Predicated region
        $region37: #{tpu_custom_call.1} parent=35 // pred_check
          %p189 = pneg %p36
        $region38: #{tpu_custom_call.1} parent=35 // pred_check_branch
          %191 = sbr.rel (%p189) target = $region40
        $region39: #{tpu_custom_call.1} parent=35 // pred_region
          %192 = dma.done [#allocation5], 16
        $region40: #{tpu_custom_call.1} parent=35 // pred_fallthru
          _
        // Predicated region
        $region41: #{tpu_custom_call.1} parent=35 // pred_check
          %p193 = pneg %p57
        $region42: #{tpu_custom_call.1} parent=35 // pred_check_branch
          %195 = sbr.rel (%p193) target = $region44
        $region43: #{tpu_custom_call.1} parent=35 // pred_region
          %196 = dma.done [#allocation7], 16
        $region44: #{tpu_custom_call.1} parent=35 // pred_fallthru
          _
        %197 = sfence
        %p198 = pneg %p36
        %p199 = pneg %p33
        %p200 = pneg %p57
        %p201 = pneg %p54
        %p202 = scmp.lt.s32.totalorder %s20, 1
        %s203 = scalar_select %p202, %s20, 1
        %s204 = smul.addr %s203, 2
        %s205 = smul.addr %s204, 2
        %s206 = scalar_lea.vmem %s2, %s205
        %p207 = pneg %p83
        %p208 = pneg %p80
        %p209 = pneg %p104
        %p210 = pneg %p101
        %p211 = pneg %p130
        %p212 = pneg %p127
        %s213 = sand.u32 %s117, 1
        %s214 = scalar_lea.sflag [#allocation4], %s213
        %s215 = sand.u32 %s117, 1
        %s216 = smul.addr %s215, 16
        %s217 = scalar_lea.vmem [#allocation8], %s216
        %p218 = scmp.lt.s32.totalorder %s20, 1
        %s219 = scalar_select %p218, %s20, 1
        %s220 = smul.addr %s219, 2
        %s221 = smul.addr %s220, 2
        %s222 = scalar_lea.vmem %s2, %s221
        %224 = vst [vmem:[#allocation2] sm:$0xff] 0.0
        %225 = vst [vmem:[#allocation2 + $0x8] sm:$0xff] 0.0
        %226 = vst [vmem:[#allocation2 + $0x10] sm:$0xff] 0.0
        %227 = vst [vmem:[#allocation2 + $0x18] sm:$0xff] 0.0
        %228 = vst [vmem:[#allocation2 + $0x20] sm:$0xff] 0.0
        %229 = vst [vmem:[#allocation2 + $0x28] sm:$0xff] 0.0
        %230 = vst [vmem:[#allocation2 + $0x30] sm:$0xff] 0.0
        %231 = vst [vmem:[#allocation2 + $0x38] sm:$0xff] 0.0
        %232 = vst [vmem:[#allocation2 + $0x40] sm:$0xff] 0.0
        %233 = vst [vmem:[#allocation2 + $0x48] sm:$0xff] 0.0
        %234 = vst [vmem:[#allocation2 + $0x50] sm:$0xff] 0.0
        %235 = vst [vmem:[#allocation2 + $0x58] sm:$0xff] 0.0
        %236 = vst [vmem:[#allocation2 + $0x60] sm:$0xff] 0.0
        %237 = vst [vmem:[#allocation2 + $0x68] sm:$0xff] 0.0
        %238 = vst [vmem:[#allocation2 + $0x70] sm:$0xff] 0.0
        %239 = vst [vmem:[#allocation2 + $0x78] sm:$0xff] 0.0
        %240 = vst [vmem:[#allocation2 + $0x80] sm:$0xff] 0.0
        %241 = vst [vmem:[#allocation2 + $0x88] sm:$0xff] 0.0
        %242 = vst [vmem:[#allocation2 + $0x90] sm:$0xff] 0.0
        %243 = vst [vmem:[#allocation2 + $0x98] sm:$0xff] 0.0
        %244 = vst [vmem:[#allocation2 + $0xa0] sm:$0xff] 0.0
        %245 = vst [vmem:[#allocation2 + $0xa8] sm:$0xff] 0.0
        %246 = vst [vmem:[#allocation2 + $0xb0] sm:$0xff] 0.0
        %247 = vst [vmem:[#allocation2 + $0xb8] sm:$0xff] 0.0
        %248 = vst [vmem:[#allocation2 + $0xc0] sm:$0xff] 0.0
        %249 = vst [vmem:[#allocation2 + $0xc8] sm:$0xff] 0.0
        %250 = vst [vmem:[#allocation2 + $0xd0] sm:$0xff] 0.0
        %251 = vst [vmem:[#allocation2 + $0xd8] sm:$0xff] 0.0
        %252 = vst [vmem:[#allocation2 + $0xe0] sm:$0xff] 0.0
        %253 = vst [vmem:[#allocation2 + $0xe8] sm:$0xff] 0.0
        %254 = vst [vmem:[#allocation2 + $0xf0] sm:$0xff] 0.0
        %255 = vst [vmem:[#allocation2 + $0xf8] sm:$0xff] 0.0
        %256 = vst [vmem:[#allocation2 + $0x100] sm:$0xff] 0.0
        %257 = vst [vmem:[#allocation2 + $0x108] sm:$0xff] 0.0
        %258 = vst [vmem:[#allocation2 + $0x110] sm:$0xff] 0.0
        %259 = vst [vmem:[#allocation2 + $0x118] sm:$0xff] 0.0
        %260 = vst [vmem:[#allocation2 + $0x120] sm:$0xff] 0.0
        %261 = vst [vmem:[#allocation2 + $0x128] sm:$0xff] 0.0
        %262 = vst [vmem:[#allocation2 + $0x130] sm:$0xff] 0.0
        %263 = vst [vmem:[#allocation2 + $0x138] sm:$0xff] 0.0
        %264 = vst [vmem:[#allocation2 + $0x140] sm:$0xff] 0.0
        %265 = vst [vmem:[#allocation2 + $0x148] sm:$0xff] 0.0
        %266 = vst [vmem:[#allocation2 + $0x150] sm:$0xff] 0.0
        %267 = vst [vmem:[#allocation2 + $0x158] sm:$0xff] 0.0
        %268 = vst [vmem:[#allocation2 + $0x160] sm:$0xff] 0.0
        %269 = vst [vmem:[#allocation2 + $0x168] sm:$0xff] 0.0
        %270 = vst [vmem:[#allocation2 + $0x170] sm:$0xff] 0.0
        %271 = vst [vmem:[#allocation2 + $0x178] sm:$0xff] 0.0
        %272 = vst [vmem:[#allocation2 + $0x180] sm:$0xff] 0.0
        %273 = vst [vmem:[#allocation2 + $0x188] sm:$0xff] 0.0
        %274 = vst [vmem:[#allocation2 + $0x190] sm:$0xff] 0.0
        %275 = vst [vmem:[#allocation2 + $0x198] sm:$0xff] 0.0
        %276 = vst [vmem:[#allocation2 + $0x1a0] sm:$0xff] 0.0
        %277 = vst [vmem:[#allocation2 + $0x1a8] sm:$0xff] 0.0
        %278 = vst [vmem:[#allocation2 + $0x1b0] sm:$0xff] 0.0
        %279 = vst [vmem:[#allocation2 + $0x1b8] sm:$0xff] 0.0
        %280 = vst [vmem:[#allocation2 + $0x1c0] sm:$0xff] 0.0
        %281 = vst [vmem:[#allocation2 + $0x1c8] sm:$0xff] 0.0
        %282 = vst [vmem:[#allocation2 + $0x1d0] sm:$0xff] 0.0
        %283 = vst [vmem:[#allocation2 + $0x1d8] sm:$0xff] 0.0
        %284 = vst [vmem:[#allocation2 + $0x1e0] sm:$0xff] 0.0
        %285 = vst [vmem:[#allocation2 + $0x1e8] sm:$0xff] 0.0
        %286 = vst [vmem:[#allocation2 + $0x1f0] sm:$0xff] 0.0
        %287 = vst [vmem:[#allocation2 + $0x1f8] sm:$0xff] 0.0
        %288 = vst [vmem:[#allocation2 + $0x200] sm:$0xff] 0.0
        %289 = vst [vmem:[#allocation2 + $0x208] sm:$0xff] 0.0
        %290 = vst [vmem:[#allocation2 + $0x210] sm:$0x1f] 0.0
        %291 = vst [vmem:[#allocation2 + $0x218] sm:$0x1f] 0.0
        %292 = vst [vmem:[#allocation2 + $0x220] sm:$0x1f] 0.0
        %293 = vst [vmem:[#allocation2 + $0x228] sm:$0x1f] 0.0
        %294 = vst [vmem:[#allocation2 + $0x230] sm:$0x1f] 0.0
        %295 = vst [vmem:[#allocation2 + $0x238] sm:$0x1f] 0.0
        %296 = vst [vmem:[#allocation2 + $0x240] sm:$0x1f] 0.0
        %297 = vst [vmem:[#allocation2 + $0x248] sm:$0x1f] 0.0
        %298 = vst [vmem:[#allocation2 + $0x250] sm:$0x1f] 0.0
        %299 = vst [vmem:[#allocation2 + $0x258] sm:$0x1f] 0.0
        %300 = vst [vmem:[#allocation2 + $0x260] sm:$0x1f] 0.0
        %301 = vst [vmem:[#allocation2 + $0x268] sm:$0x1f] 0.0
        %302 = vst [vmem:[#allocation2 + $0x270] sm:$0x1f] 0.0
        %303 = vst [vmem:[#allocation2 + $0x278] sm:$0x1f] 0.0
        %304 = vst [vmem:[#allocation2 + $0x280] sm:$0x1f] 0.0
        %305 = vst [vmem:[#allocation2 + $0x288] sm:$0x1f] 0.0
        %306 = vst [vmem:[#allocation2 + $0x290] sm:$0x1f] 0.0
        %307 = vst [vmem:[#allocation2 + $0x298] sm:$0x1f] 0.0
        %308 = vst [vmem:[#allocation2 + $0x2a0] sm:$0x1f] 0.0
        %309 = vst [vmem:[#allocation2 + $0x2a8] sm:$0x1f] 0.0
        %310 = vst [vmem:[#allocation2 + $0x2b0] sm:$0x1f] 0.0
        %311 = vst [vmem:[#allocation2 + $0x2b8] sm:$0x1f] 0.0
        %v312 = vld [vmem:[%s3] sm:$0xf]
        %v313 = vld [vmem:[%s3 + $0x4] sm:$0xf]
        %v314 = vld [vmem:[%s3 + $0x8] sm:$0xf]
        %v315 = vld [vmem:[%s3 + $0xc] sm:$0x7]
        %v316 = vld [vmem:[%s222] sm:$0xf]
        %v321 = vunpack.c.l.b16 %v312
        %v322 = vunpack.c.l.b16 %v313
        %v323 = vunpack.c.l.b16 %v314
        %v324 = vunpack.c.l.b16 %v315
        %v325 = vpack.c.b16 %v322, %v321
        %v326 = vpack.c.b16 %v324, %v323
        %v329 = vunpack.c.l.s4 1983009808
        %v330 = vunpack.c.0.s8 %v329
        %v331 = vlaneseq
        %v332 = vshrl.u32 %v331, 7
        %v333 = vsub.s32 %v330, %v332
        %v334 = vrot.slane %v316, %v333
        %v335 = vcombine.high %v334, %v334
        %vm336 = vcmask 31744
        %v338 = vsel %vm336, %v325, 0
        %v341 = vsel %vm336, %v326, 0
        %vm343 = vcmask 1041408
        %v345 = vsel %vm343, %v334, 0
        %v348 = vsel %vm343, %v335, 0
        %350 = vmatprep.subr.bf16.mxu0 0
        %351 = vmatpush1.bf16.msra.mxu0 0
        %352 = vmatprep.subr.bf16.mxu0 0
        %353 = vmatpush1.bf16.msra.mxu0 0
        %354 = vmatprep.subr.bf16.mxu0 0
        %355 = vmatpush1.bf16.msra.mxu0 0
        %356 = vmatprep.subr.bf16.mxu0 0
        %357 = vmatpush1.bf16.msra.mxu0 0
        %358 = vmatprep.subr.bf16.mxu0 0
        %359 = vmatpush1.bf16.msra.mxu0 0
        %360 = vmatprep.subr.bf16.mxu0 0
        %361 = vmatpush1.bf16.msra.mxu0 0
        %362 = vmatprep.subr.bf16.mxu0 0
        %363 = vmatpush1.bf16.msra.mxu0 0
        %364 = vmatprep.subr.bf16.mxu0 %v348
        %365 = vmatpush1.bf16.msra.mxu0 %v345
        %366 = vmatprep.subr.bf16.mxu0 0
        %367 = vmatpush2.bf16.msra.mxu0 0
        %368 = vmatprep.subr.bf16.mxu0 0
        %369 = vmatpush2.bf16.msra.mxu0 0
        %370 = vmatprep.subr.bf16.mxu0 0
        %371 = vmatpush2.bf16.msra.mxu0 0
        %372 = vmatprep.subr.bf16.mxu0 0
        %373 = vmatpush2.bf16.msra.mxu0 0
        %374 = vmatprep.subr.bf16.mxu0 0
        %375 = vmatpush2.bf16.msra.mxu0 0
        %376 = vmatprep.subr.bf16.mxu0 0
        %377 = vmatpush2.bf16.msra.mxu0 0
        %378 = vmatprep.subr.bf16.mxu0 0
        %379 = vmatpush2.bf16.msra.mxu0 0
        %380 = vmatprep.subr.bf16.mxu0 0
        %381 = vmatpush2.bf16.msra.mxu0 0
        %382 = vmatprep.mubr.bf16.mxu0 0
        %383 = vmatmul.mubr.bf16.gmra.mxu0 %v338
        %v384 = vpop.f32.mrf.mxu0
        %v385 = vadd.f32 0.0, %v384
        %v386 = vpop.f32.mrf.mxu0
        %v387 = vadd.f32 0.0, %v386
        %v388 = vpop.f32.mrf.mxu0
        %v389 = vadd.f32 0.0, %v388
        %v390 = vpop.f32.mrf.mxu0
        %v391 = vadd.f32 0.0, %v390
        %392 = vmatprep.mubr.bf16.mxu0 0
        %393 = vmatmul.mubr.bf16.gmra.mxu0 %v341
        %v394 = vpop.f32.mrf.mxu0
        %v395 = vadd.f32 0.0, %v394
        %v396 = vpop.f32.mrf.mxu0
        %v397 = vadd.f32 0.0, %v396
        %v398 = vpop.f32.mrf.mxu0
        %v399 = vadd.f32 0.0, %v398
        %v400 = vpop.f32.mrf.mxu0
        %v401 = vadd.f32 0.0, %v400
        %402 = vdwg.mxu0
        %vm403 = vcmask 130048
        %404 = vst.msk [vmem:[#allocation2 + $0x18] sm:$0xff] %vm403, %v385
        %405 = vst.msk [vmem:[#allocation2 + $0xc8] sm:$0xff] %vm403, %v389
        %406 = vst.msk [vmem:[#allocation2 + $0x178] sm:$0xff] %vm403, %v395
        %vm407 = vcmask 126976
        %408 = vst.msk [vmem:[#allocation2 + $0x228] sm:$0x1f] %vm407, %v399
        %413 = vrot.lane.b32.xlu0 %v385, 112
        %v414 = vpop.permute.xlu0 %413
        %415 = vrot.lane.b32.xlu0 %v389, 112
        %v416 = vpop.permute.xlu0 %415
        %417 = vrot.lane.b32.xlu0 %v395, 112
        %v418 = vpop.permute.xlu0 %417
        %419 = vrot.lane.b32.xlu0 %v399, 112
        %v420 = vpop.permute.xlu0 %419
        %425 = vst.msk [vmem:[#allocation2 + $0x20] sm:$0xff] %vm403, %v414
        %426 = vst.msk [vmem:[#allocation2 + $0xd0] sm:$0xff] %vm403, %v416
        %427 = vst.msk [vmem:[#allocation2 + $0x180] sm:$0xff] %vm403, %v418
        %428 = vst.msk [vmem:[#allocation2 + $0x230] sm:$0x1f] %vm407, %v420
        %429 = vrot.lane.b32.xlu0 %v385, 96
        %v430 = vpop.permute.xlu0 %429
        %431 = vrot.lane.b32.xlu0 %v389, 96
        %v432 = vpop.permute.xlu0 %431
        %433 = vrot.lane.b32.xlu0 %v395, 96
        %v434 = vpop.permute.xlu0 %433
        %435 = vrot.lane.b32.xlu0 %v399, 96
        %v436 = vpop.permute.xlu0 %435
        %441 = vst.msk [vmem:[#allocation2 + $0x28] sm:$0xff] %vm403, %v430
        %442 = vst.msk [vmem:[#allocation2 + $0xd8] sm:$0xff] %vm403, %v432
        %443 = vst.msk [vmem:[#allocation2 + $0x188] sm:$0xff] %vm403, %v434
        %444 = vst.msk [vmem:[#allocation2 + $0x238] sm:$0x1f] %vm407, %v436
        %445 = vrot.lane.b32.xlu0 %v385, 80
        %v446 = vpop.permute.xlu0 %445
        %447 = vrot.lane.b32.xlu0 %v389, 80
        %v448 = vpop.permute.xlu0 %447
        %449 = vrot.lane.b32.xlu0 %v395, 80
        %v450 = vpop.permute.xlu0 %449
        %451 = vrot.lane.b32.xlu0 %v399, 80
        %v452 = vpop.permute.xlu0 %451
        %457 = vst.msk [vmem:[#allocation2 + $0x30] sm:$0xff] %vm403, %v446
        %458 = vst.msk [vmem:[#allocation2 + $0xe0] sm:$0xff] %vm403, %v448
        %459 = vst.msk [vmem:[#allocation2 + $0x190] sm:$0xff] %vm403, %v450
        %460 = vst.msk [vmem:[#allocation2 + $0x240] sm:$0x1f] %vm407, %v452
        %461 = vrot.lane.b32.xlu0 %v385, 64
        %v462 = vpop.permute.xlu0 %461
        %463 = vrot.lane.b32.xlu0 %v389, 64
        %v464 = vpop.permute.xlu0 %463
        %465 = vrot.lane.b32.xlu0 %v395, 64
        %v466 = vpop.permute.xlu0 %465
        %467 = vrot.lane.b32.xlu0 %v399, 64
        %v468 = vpop.permute.xlu0 %467
        %473 = vst.msk [vmem:[#allocation2 + $0x38] sm:$0xff] %vm403, %v462
        %474 = vst.msk [vmem:[#allocation2 + $0xe8] sm:$0xff] %vm403, %v464
        %475 = vst.msk [vmem:[#allocation2 + $0x198] sm:$0xff] %vm403, %v466
        %476 = vst.msk [vmem:[#allocation2 + $0x248] sm:$0x1f] %vm407, %v468
        %477 = vrot.lane.b32.xlu0 %v385, 48
        %v478 = vpop.permute.xlu0 %477
        %479 = vrot.lane.b32.xlu0 %v389, 48
        %v480 = vpop.permute.xlu0 %479
        %481 = vrot.lane.b32.xlu0 %v395, 48
        %v482 = vpop.permute.xlu0 %481
        %483 = vrot.lane.b32.xlu0 %v399, 48
        %v484 = vpop.permute.xlu0 %483
        %489 = vst.msk [vmem:[#allocation2 + $0x40] sm:$0xff] %vm403, %v478
        %490 = vst.msk [vmem:[#allocation2 + $0xf0] sm:$0xff] %vm403, %v480
        %491 = vst.msk [vmem:[#allocation2 + $0x1a0] sm:$0xff] %vm403, %v482
        %492 = vst.msk [vmem:[#allocation2 + $0x250] sm:$0x1f] %vm407, %v484
        %493 = vrot.lane.b32.xlu0 %v385, 32
        %v494 = vpop.permute.xlu0 %493
        %495 = vrot.lane.b32.xlu0 %v389, 32
        %v496 = vpop.permute.xlu0 %495
        %497 = vrot.lane.b32.xlu0 %v395, 32
        %v498 = vpop.permute.xlu0 %497
        %499 = vrot.lane.b32.xlu0 %v399, 32
        %v500 = vpop.permute.xlu0 %499
        %505 = vst.msk [vmem:[#allocation2 + $0x48] sm:$0xff] %vm403, %v494
        %506 = vst.msk [vmem:[#allocation2 + $0xf8] sm:$0xff] %vm403, %v496
        %507 = vst.msk [vmem:[#allocation2 + $0x1a8] sm:$0xff] %vm403, %v498
        %508 = vst.msk [vmem:[#allocation2 + $0x258] sm:$0x1f] %vm407, %v500
        %509 = vrot.lane.b32.xlu0 %v385, 16
        %v510 = vpop.permute.xlu0 %509
        %511 = vrot.lane.b32.xlu0 %v389, 16
        %v512 = vpop.permute.xlu0 %511
        %513 = vrot.lane.b32.xlu0 %v395, 16
        %v514 = vpop.permute.xlu0 %513
        %515 = vrot.lane.b32.xlu0 %v399, 16
        %v516 = vpop.permute.xlu0 %515
        %521 = vst.msk [vmem:[#allocation2 + $0x50] sm:$0xff] %vm403, %v510
        %522 = vst.msk [vmem:[#allocation2 + $0x100] sm:$0xff] %vm403, %v512
        %523 = vst.msk [vmem:[#allocation2 + $0x1b0] sm:$0xff] %vm403, %v514
        %524 = vst.msk [vmem:[#allocation2 + $0x260] sm:$0x1f] %vm407, %v516
        %525 = vst.msk [vmem:[#allocation2 + $0x58] sm:$0xff] %vm403, %v387
        %526 = vst.msk [vmem:[#allocation2 + $0x108] sm:$0xff] %vm403, %v391
        %527 = vst.msk [vmem:[#allocation2 + $0x1b8] sm:$0xff] %vm403, %v397
        %528 = vst.msk [vmem:[#allocation2 + $0x268] sm:$0x1f] %vm407, %v401
        %533 = vrot.lane.b32.xlu0 %v387, 112
        %v534 = vpop.permute.xlu0 %533
        %535 = vrot.lane.b32.xlu0 %v391, 112
        %v536 = vpop.permute.xlu0 %535
        %537 = vrot.lane.b32.xlu0 %v397, 112
        %v538 = vpop.permute.xlu0 %537
        %539 = vrot.lane.b32.xlu0 %v401, 112
        %v540 = vpop.permute.xlu0 %539
        %545 = vst.msk [vmem:[#allocation2 + $0x60] sm:$0xff] %vm403, %v534
        %546 = vst.msk [vmem:[#allocation2 + $0x110] sm:$0xff] %vm403, %v536
        %547 = vst.msk [vmem:[#allocation2 + $0x1c0] sm:$0xff] %vm403, %v538
        %548 = vst.msk [vmem:[#allocation2 + $0x270] sm:$0x1f] %vm407, %v540
        %549 = vrot.lane.b32.xlu0 %v387, 96
        %v550 = vpop.permute.xlu0 %549
        %551 = vrot.lane.b32.xlu0 %v391, 96
        %v552 = vpop.permute.xlu0 %551
        %553 = vrot.lane.b32.xlu0 %v397, 96
        %v554 = vpop.permute.xlu0 %553
        %555 = vrot.lane.b32.xlu0 %v401, 96
        %v556 = vpop.permute.xlu0 %555
        %561 = vst.msk [vmem:[#allocation2 + $0x68] sm:$0xff] %vm403, %v550
        %562 = vst.msk [vmem:[#allocation2 + $0x118] sm:$0xff] %vm403, %v552
        %563 = vst.msk [vmem:[#allocation2 + $0x1c8] sm:$0xff] %vm403, %v554
        %564 = vst.msk [vmem:[#allocation2 + $0x278] sm:$0x1f] %vm407, %v556
        %565 = vrot.lane.b32.xlu0 %v387, 80
        %v566 = vpop.permute.xlu0 %565
        %567 = vrot.lane.b32.xlu0 %v391, 80
        %v568 = vpop.permute.xlu0 %567
        %569 = vrot.lane.b32.xlu0 %v397, 80
        %v570 = vpop.permute.xlu0 %569
        %571 = vrot.lane.b32.xlu0 %v401, 80
        %v572 = vpop.permute.xlu0 %571
        %577 = vst.msk [vmem:[#allocation2 + $0x70] sm:$0xff] %vm403, %v566
        %578 = vst.msk [vmem:[#allocation2 + $0x120] sm:$0xff] %vm403, %v568
        %579 = vst.msk [vmem:[#allocation2 + $0x1d0] sm:$0xff] %vm403, %v570
        %580 = vst.msk [vmem:[#allocation2 + $0x280] sm:$0x1f] %vm407, %v572
        %581 = vrot.lane.b32.xlu0 %v387, 64
        %v582 = vpop.permute.xlu0 %581
        %583 = vrot.lane.b32.xlu0 %v391, 64
        %v584 = vpop.permute.xlu0 %583
        %585 = vrot.lane.b32.xlu0 %v397, 64
        %v586 = vpop.permute.xlu0 %585
        %587 = vrot.lane.b32.xlu0 %v401, 64
        %v588 = vpop.permute.xlu0 %587
        %593 = vst.msk [vmem:[#allocation2 + $0x78] sm:$0xff] %vm403, %v582
        %594 = vst.msk [vmem:[#allocation2 + $0x128] sm:$0xff] %vm403, %v584
        %595 = vst.msk [vmem:[#allocation2 + $0x1d8] sm:$0xff] %vm403, %v586
        %596 = vst.msk [vmem:[#allocation2 + $0x288] sm:$0x1f] %vm407, %v588
        %597 = vrot.lane.b32.xlu0 %v387, 48
        %v598 = vpop.permute.xlu0 %597
        %599 = vrot.lane.b32.xlu0 %v391, 48
        %v600 = vpop.permute.xlu0 %599
        %601 = vrot.lane.b32.xlu0 %v397, 48
        %v602 = vpop.permute.xlu0 %601
        %603 = vrot.lane.b32.xlu0 %v401, 48
        %v604 = vpop.permute.xlu0 %603
        %609 = vst.msk [vmem:[#allocation2 + $0x80] sm:$0xff] %vm403, %v598
        %610 = vst.msk [vmem:[#allocation2 + $0x130] sm:$0xff] %vm403, %v600
        %611 = vst.msk [vmem:[#allocation2 + $0x1e0] sm:$0xff] %vm403, %v602
        %612 = vst.msk [vmem:[#allocation2 + $0x290] sm:$0x1f] %vm407, %v604
        %613 = vrot.lane.b32.xlu0 %v387, 32
        %v614 = vpop.permute.xlu0 %613
        %615 = vrot.lane.b32.xlu0 %v391, 32
        %v616 = vpop.permute.xlu0 %615
        %617 = vrot.lane.b32.xlu0 %v397, 32
        %v618 = vpop.permute.xlu0 %617
        %619 = vrot.lane.b32.xlu0 %v401, 32
        %v620 = vpop.permute.xlu0 %619
        %625 = vst.msk [vmem:[#allocation2 + $0x88] sm:$0xff] %vm403, %v614
        %626 = vst.msk [vmem:[#allocation2 + $0x138] sm:$0xff] %vm403, %v616
        %627 = vst.msk [vmem:[#allocation2 + $0x1e8] sm:$0xff] %vm403, %v618
        %628 = vst.msk [vmem:[#allocation2 + $0x298] sm:$0x1f] %vm407, %v620
        %629 = vrot.lane.b32.xlu0 %v387, 16
        %v630 = vpop.permute.xlu0 %629
        %631 = vrot.lane.b32.xlu0 %v391, 16
        %v632 = vpop.permute.xlu0 %631
        %633 = vrot.lane.b32.xlu0 %v397, 16
        %v634 = vpop.permute.xlu0 %633
        %635 = vrot.lane.b32.xlu0 %v401, 16
        %v636 = vpop.permute.xlu0 %635
        %641 = vst.msk [vmem:[#allocation2 + $0x90] sm:$0xff] %vm403, %v630
        %642 = vst.msk [vmem:[#allocation2 + $0x140] sm:$0xff] %vm403, %v632
        %643 = vst.msk [vmem:[#allocation2 + $0x1f0] sm:$0xff] %vm403, %v634
        %644 = vst.msk [vmem:[#allocation2 + $0x2a0] sm:$0x1f] %vm407, %v636
        %s645 = sld [smem:[#allocation6]]
        %s646 = scalar_lea.vmem [#allocation2], 24
        %v647 = vld [vmem:[%s646] ss:$8 sm:$0xf]
        %v648 = vld [vmem:[%s646] ss:$8 sm:$0xf0]
        %v649 = vor.u32 %v647, %v648
        %s650 = scalar_lea.vmem [#allocation2], 88
        %v651 = vld [vmem:[%s650] ss:$8 sm:$0xf]
        %v652 = vld [vmem:[%s650] ss:$8 sm:$0xf0]
        %v653 = vor.u32 %v651, %v652
        %s654 = sld [smem:[#allocation3]]
        %v655 = vstv %s654
        %v656 = vadd.f32 %v649, %v655
        %v657 = vadd.f32 %v653, %v655
        %v658 = vmax.f32 %v656, 0.0
        %v659 = vmax.f32 %v657, 0.0
        %v660 = vstv %s645
        %v661 = vmul.f32 %v660, %v658
        %v662 = vmul.f32 %v660, %v659
        %s663 = scalar_lea.vmem [#allocation2], 17
        %v664 = vld [vmem:[%s663] ss:$8 sm:$0xf]
        %v665 = vld [vmem:[%s663] ss:$8 sm:$0xf0]
        %v666 = vor.u32 %v664, %v665
        %s667 = scalar_lea.vmem [#allocation2], 81
        %v668 = vld [vmem:[%s667] ss:$8 sm:$0xf]
        %v669 = vld [vmem:[%s667] ss:$8 sm:$0xf0]
        %v670 = vor.u32 %v668, %v669
        %s671 = scalar_lea.vmem [#allocation2], 28
        %v672 = vld [vmem:[%s671] ss:$8 sm:$0xf]
        %v673 = vld [vmem:[%s671] ss:$8 sm:$0xf0]
        %v674 = vor.u32 %v672, %v673
        %s675 = scalar_lea.vmem [#allocation2], 92
        %v676 = vld [vmem:[%s675] ss:$8 sm:$0xf]
        %v677 = vld [vmem:[%s675] ss:$8 sm:$0xf0]
        %v678 = vor.u32 %v676, %v677
        %v679 = vadd.f32 %v666, %v674
        %v680 = vadd.f32 %v670, %v678
        %s681 = scalar_lea.vmem [#allocation2], 39
        %v682 = vld [vmem:[%s681] ss:$8 sm:$0xf]
        %v683 = vld [vmem:[%s681] ss:$8 sm:$0xf0]
        %v684 = vor.u32 %v682, %v683
        %s685 = scalar_lea.vmem [#allocation2], 103
        %v686 = vld [vmem:[%s685] ss:$8 sm:$0xf]
        %v687 = vld [vmem:[%s685] ss:$8 sm:$0xf0]
        %v688 = vor.u32 %v686, %v687
        %v689 = vadd.f32 %v679, %v684
        %v690 = vadd.f32 %v680, %v688
        %v693 = vlaneseq
        %v694 = vshrl.u32 %v693, 7
        %v695 = vsub.s32 0, %v694
        %v696 = vrot.slane %v689, %v695
        %v697 = vlaneseq
        %v698 = vshrl.u32 %v697, 7
        %v699 = vsub.s32 1, %v698
        %v700 = vrot.slane %v689, %v699
        %v701 = vlaneseq
        %v702 = vshrl.u32 %v701, 7
        %v703 = vsub.s32 2, %v702
        %v704 = vrot.slane %v689, %v703
        %v705 = vlaneseq
        %v706 = vshrl.u32 %v705, 7
        %v707 = vsub.s32 3, %v706
        %v708 = vrot.slane %v689, %v707
        %v709 = vlaneseq
        %v710 = vshrl.u32 %v709, 7
        %v711 = vsub.s32 4, %v710
        %v712 = vrot.slane %v689, %v711
        %v713 = vlaneseq
        %v714 = vshrl.u32 %v713, 7
        %v715 = vsub.s32 5, %v714
        %v716 = vrot.slane %v689, %v715
        %v717 = vlaneseq
        %v718 = vshrl.u32 %v717, 7
        %v719 = vsub.s32 6, %v718
        %v720 = vrot.slane %v689, %v719
        %v721 = vlaneseq
        %v722 = vshrl.u32 %v721, 7
        %v723 = vsub.s32 7, %v722
        %v724 = vrot.slane %v689, %v723
        %v725 = vlaneseq
        %v726 = vshrl.u32 %v725, 7
        %v727 = vsub.s32 0, %v726
        %v728 = vrot.slane %v690, %v727
        %v729 = vlaneseq
        %v730 = vshrl.u32 %v729, 7
        %v731 = vsub.s32 1, %v730
        %v732 = vrot.slane %v690, %v731
        %v733 = vlaneseq
        %v734 = vshrl.u32 %v733, 7
        %v735 = vsub.s32 2, %v734
        %v736 = vrot.slane %v690, %v735
        %v737 = vlaneseq
        %v738 = vshrl.u32 %v737, 7
        %v739 = vsub.s32 3, %v738
        %v740 = vrot.slane %v690, %v739
        %v741 = vlaneseq
        %v742 = vshrl.u32 %v741, 7
        %v743 = vsub.s32 4, %v742
        %v744 = vrot.slane %v690, %v743
        %v745 = vlaneseq
        %v746 = vshrl.u32 %v745, 7
        %v747 = vsub.s32 5, %v746
        %v748 = vrot.slane %v690, %v747
        %v749 = vlaneseq
        %v750 = vshrl.u32 %v749, 7
        %v751 = vsub.s32 6, %v750
        %v752 = vrot.slane %v690, %v751
        %v753 = vlaneseq
        %v754 = vshrl.u32 %v753, 7
        %v755 = vsub.s32 7, %v754
        %v756 = vrot.slane %v690, %v755
        %757 = vrot.lane.b32.xlu0 %v696, 1
        %v758 = vpop.permute.xlu0 %757
        %759 = vrot.lane.b32.xlu0 %v700, 1
        %v760 = vpop.permute.xlu0 %759
        %761 = vrot.lane.b32.xlu0 %v704, 1
        %v762 = vpop.permute.xlu0 %761
        %763 = vrot.lane.b32.xlu0 %v708, 1
        %v764 = vpop.permute.xlu0 %763
        %765 = vrot.lane.b32.xlu0 %v712, 1
        %v766 = vpop.permute.xlu0 %765
        %767 = vrot.lane.b32.xlu0 %v716, 1
        %v768 = vpop.permute.xlu0 %767
        %769 = vrot.lane.b32.xlu0 %v720, 1
        %v770 = vpop.permute.xlu0 %769
        %771 = vrot.lane.b32.xlu0 %v724, 1
        %v772 = vpop.permute.xlu0 %771
        %773 = vrot.lane.b32.xlu0 %v728, 1
        %v774 = vpop.permute.xlu0 %773
        %775 = vrot.lane.b32.xlu0 %v732, 1
        %v776 = vpop.permute.xlu0 %775
        %777 = vrot.lane.b32.xlu0 %v736, 1
        %v778 = vpop.permute.xlu0 %777
        %779 = vrot.lane.b32.xlu0 %v740, 1
        %v780 = vpop.permute.xlu0 %779
        %781 = vrot.lane.b32.xlu0 %v744, 1
        %v782 = vpop.permute.xlu0 %781
        %783 = vrot.lane.b32.xlu0 %v748, 1
        %v784 = vpop.permute.xlu0 %783
        %785 = vrot.lane.b32.xlu0 %v752, 1
        %v786 = vpop.permute.xlu0 %785
        %787 = vrot.lane.b32.xlu0 %v756, 1
        %v788 = vpop.permute.xlu0 %787
        %vm789 = vcmask 7168
        %v790 = vsel %vm789, %v758, %v760
        %v791 = vsel %vm789, %v760, %v762
        %v792 = vsel %vm789, %v762, %v764
        %v793 = vsel %vm789, %v764, %v766
        %v794 = vsel %vm789, %v766, %v768
        %v795 = vsel %vm789, %v768, %v770
        %v796 = vsel %vm789, %v770, %v772
        %v797 = vsel %vm789, %v772, %v774
        %v798 = vsel %vm789, %v774, %v776
        %v799 = vsel %vm789, %v776, %v778
        %v800 = vsel %vm789, %v778, %v780
        %v801 = vsel %vm789, %v780, %v782
        %v802 = vsel %vm789, %v782, %v784
        %v803 = vsel %vm789, %v784, %v786
        %v804 = vsel %vm789, %v786, %v788
        %v821 = vsel %vm789, 0.0, %v758
        %s822 = scalar_lea.vmem [#allocation2], 18
        %v823 = vld [vmem:[%s822] ss:$8 sm:$0xf]
        %v824 = vld [vmem:[%s822] ss:$8 sm:$0xf0]
        %v825 = vor.u32 %v823, %v824
        %s826 = scalar_lea.vmem [#allocation2], 82
        %v827 = vld [vmem:[%s826] ss:$8 sm:$0xf]
        %v828 = vld [vmem:[%s826] ss:$8 sm:$0xf0]
        %v829 = vor.u32 %v827, %v828
        %s830 = scalar_lea.vmem [#allocation2], 29
        %v831 = vld [vmem:[%s830] ss:$8 sm:$0xf]
        %v832 = vld [vmem:[%s830] ss:$8 sm:$0xf0]
        %v833 = vor.u32 %v831, %v832
        %s834 = scalar_lea.vmem [#allocation2], 93
        %v835 = vld [vmem:[%s834] ss:$8 sm:$0xf]
        %v836 = vld [vmem:[%s834] ss:$8 sm:$0xf0]
        %v837 = vor.u32 %v835, %v836
        %v838 = vadd.f32 %v825, %v833
        %v839 = vadd.f32 %v829, %v837
        %s840 = scalar_lea.vmem [#allocation2], 208
        %v841 = vld [vmem:[%s840] ss:$8 sm:$0xf]
        %v842 = vld [vmem:[%s840] ss:$8 sm:$0xf0]
        %v843 = vor.u32 %v841, %v842
        %s844 = scalar_lea.vmem [#allocation2], 272
        %v845 = vld [vmem:[%s844] ss:$8 sm:$0xf]
        %v846 = vld [vmem:[%s844] ss:$8 sm:$0xf0]
        %v847 = vor.u32 %v845, %v846
        %v848 = vadd.f32 %v838, %v843
        %v849 = vadd.f32 %v839, %v847
        %v852 = vlaneseq
        %v853 = vshrl.u32 %v852, 7
        %v854 = vsub.s32 0, %v853
        %v855 = vrot.slane %v848, %v854
        %v856 = vlaneseq
        %v857 = vshrl.u32 %v856, 7
        %v858 = vsub.s32 1, %v857
        %v859 = vrot.slane %v848, %v858
        %v860 = vlaneseq
        %v861 = vshrl.u32 %v860, 7
        %v862 = vsub.s32 2, %v861
        %v863 = vrot.slane %v848, %v862
        %v864 = vlaneseq
        %v865 = vshrl.u32 %v864, 7
        %v866 = vsub.s32 3, %v865
        %v867 = vrot.slane %v848, %v866
        %v868 = vlaneseq
        %v869 = vshrl.u32 %v868, 7
        %v870 = vsub.s32 4, %v869
        %v871 = vrot.slane %v848, %v870
        %v872 = vlaneseq
        %v873 = vshrl.u32 %v872, 7
        %v874 = vsub.s32 5, %v873
        %v875 = vrot.slane %v848, %v874
        %v876 = vlaneseq
        %v877 = vshrl.u32 %v876, 7
        %v878 = vsub.s32 6, %v877
        %v879 = vrot.slane %v848, %v878
        %v880 = vlaneseq
        %v881 = vshrl.u32 %v880, 7
        %v882 = vsub.s32 7, %v881
        %v883 = vrot.slane %v848, %v882
        %v884 = vlaneseq
        %v885 = vshrl.u32 %v884, 7
        %v886 = vsub.s32 0, %v885
        %v887 = vrot.slane %v849, %v886
        %v888 = vlaneseq
        %v889 = vshrl.u32 %v888, 7
        %v890 = vsub.s32 1, %v889
        %v891 = vrot.slane %v849, %v890
        %v892 = vlaneseq
        %v893 = vshrl.u32 %v892, 7
        %v894 = vsub.s32 2, %v893
        %v895 = vrot.slane %v849, %v894
        %v896 = vlaneseq
        %v897 = vshrl.u32 %v896, 7
        %v898 = vsub.s32 3, %v897
        %v899 = vrot.slane %v849, %v898
        %v900 = vlaneseq
        %v901 = vshrl.u32 %v900, 7
        %v902 = vsub.s32 4, %v901
        %v903 = vrot.slane %v849, %v902
        %v904 = vlaneseq
        %v905 = vshrl.u32 %v904, 7
        %v906 = vsub.s32 5, %v905
        %v907 = vrot.slane %v849, %v906
        %v908 = vlaneseq
        %v909 = vshrl.u32 %v908, 7
        %v910 = vsub.s32 6, %v909
        %v911 = vrot.slane %v849, %v910
        %v912 = vlaneseq
        %v913 = vshrl.u32 %v912, 7
        %v914 = vsub.s32 7, %v913
        %v915 = vrot.slane %v849, %v914
        %v932 = vadd.f32 %v821, %v855
        %v933 = vadd.f32 %v790, %v859
        %v934 = vadd.f32 %v791, %v863
        %v935 = vadd.f32 %v792, %v867
        %v936 = vadd.f32 %v793, %v871
        %v937 = vadd.f32 %v794, %v875
        %v938 = vadd.f32 %v795, %v879
        %v939 = vadd.f32 %v796, %v883
        %v940 = vadd.f32 %v797, %v887
        %v941 = vadd.f32 %v798, %v891
        %v942 = vadd.f32 %v799, %v895
        %v943 = vadd.f32 %v800, %v899
        %v944 = vadd.f32 %v801, %v903
        %v945 = vadd.f32 %v802, %v907
        %v946 = vadd.f32 %v803, %v911
        %v947 = vadd.f32 %v804, %v915
        %s948 = scalar_lea.vmem [#allocation2], 19
        %v949 = vld [vmem:[%s948] ss:$8 sm:$0xf]
        %v950 = vld [vmem:[%s948] ss:$8 sm:$0xf0]
        %v951 = vor.u32 %v949, %v950
        %s952 = scalar_lea.vmem [#allocation2], 83
        %v953 = vld [vmem:[%s952] ss:$8 sm:$0xf]
        %v954 = vld [vmem:[%s952] ss:$8 sm:$0xf0]
        %v955 = vor.u32 %v953, %v954
        %s956 = scalar_lea.vmem [#allocation2], 30
        %v957 = vld [vmem:[%s956] ss:$8 sm:$0xf]
        %v958 = vld [vmem:[%s956] ss:$8 sm:$0xf0]
        %v959 = vor.u32 %v957, %v958
        %s960 = scalar_lea.vmem [#allocation2], 94
        %v961 = vld [vmem:[%s960] ss:$8 sm:$0xf]
        %v962 = vld [vmem:[%s960] ss:$8 sm:$0xf0]
        %v963 = vor.u32 %v961, %v962
        %v964 = vadd.f32 %v951, %v959
        %v965 = vadd.f32 %v955, %v963
        %s966 = scalar_lea.vmem [#allocation2], 209
        %v967 = vld [vmem:[%s966] ss:$8 sm:$0xf]
        %v968 = vld [vmem:[%s966] ss:$8 sm:$0xf0]
        %v969 = vor.u32 %v967, %v968
        %s970 = scalar_lea.vmem [#allocation2], 273
        %v971 = vld [vmem:[%s970] ss:$8 sm:$0xf]
        %v972 = vld [vmem:[%s970] ss:$8 sm:$0xf0]
        %v973 = vor.u32 %v971, %v972
        %v974 = vadd.f32 %v964, %v969
        %v975 = vadd.f32 %v965, %v973
        %v978 = vlaneseq
        %v979 = vshrl.u32 %v978, 7
        %v980 = vsub.s32 0, %v979
        %v981 = vrot.slane %v974, %v980
        %v982 = vlaneseq
        %v983 = vshrl.u32 %v982, 7
        %v984 = vsub.s32 1, %v983
        %v985 = vrot.slane %v974, %v984
        %v986 = vlaneseq
        %v987 = vshrl.u32 %v986, 7
        %v988 = vsub.s32 2, %v987
        %v989 = vrot.slane %v974, %v988
        %v990 = vlaneseq
        %v991 = vshrl.u32 %v990, 7
        %v992 = vsub.s32 3, %v991
        %v993 = vrot.slane %v974, %v992
        %v994 = vlaneseq
        %v995 = vshrl.u32 %v994, 7
        %v996 = vsub.s32 4, %v995
        %v997 = vrot.slane %v974, %v996
        %v998 = vlaneseq
        %v999 = vshrl.u32 %v998, 7
        %v1000 = vsub.s32 5, %v999
        %v1001 = vrot.slane %v974, %v1000
        %v1002 = vlaneseq
        %v1003 = vshrl.u32 %v1002, 7
        %v1004 = vsub.s32 6, %v1003
        %v1005 = vrot.slane %v974, %v1004
        %v1006 = vlaneseq
        %v1007 = vshrl.u32 %v1006, 7
        %v1008 = vsub.s32 7, %v1007
        %v1009 = vrot.slane %v974, %v1008
        %v1010 = vlaneseq
        %v1011 = vshrl.u32 %v1010, 7
        %v1012 = vsub.s32 0, %v1011
        %v1013 = vrot.slane %v975, %v1012
        %v1014 = vlaneseq
        %v1015 = vshrl.u32 %v1014, 7
        %v1016 = vsub.s32 1, %v1015
        %v1017 = vrot.slane %v975, %v1016
        %v1018 = vlaneseq
        %v1019 = vshrl.u32 %v1018, 7
        %v1020 = vsub.s32 2, %v1019
        %v1021 = vrot.slane %v975, %v1020
        %v1022 = vlaneseq
        %v1023 = vshrl.u32 %v1022, 7
        %v1024 = vsub.s32 3, %v1023
        %v1025 = vrot.slane %v975, %v1024
        %v1026 = vlaneseq
        %v1027 = vshrl.u32 %v1026, 7
        %v1028 = vsub.s32 4, %v1027
        %v1029 = vrot.slane %v975, %v1028
        %v1030 = vlaneseq
        %v1031 = vshrl.u32 %v1030, 7
        %v1032 = vsub.s32 5, %v1031
        %v1033 = vrot.slane %v975, %v1032
        %v1034 = vlaneseq
        %v1035 = vshrl.u32 %v1034, 7
        %v1036 = vsub.s32 6, %v1035
        %v1037 = vrot.slane %v975, %v1036
        %v1038 = vlaneseq
        %v1039 = vshrl.u32 %v1038, 7
        %v1040 = vsub.s32 7, %v1039
        %v1041 = vrot.slane %v975, %v1040
        %1042 = vrot.lane.b32.xlu0 %v981, 127
        %v1043 = vpop.permute.xlu0 %1042
        %1044 = vrot.lane.b32.xlu0 %v985, 127
        %v1045 = vpop.permute.xlu0 %1044
        %1046 = vrot.lane.b32.xlu0 %v989, 127
        %v1047 = vpop.permute.xlu0 %1046
        %1048 = vrot.lane.b32.xlu0 %v993, 127
        %v1049 = vpop.permute.xlu0 %1048
        %1050 = vrot.lane.b32.xlu0 %v997, 127
        %v1051 = vpop.permute.xlu0 %1050
        %1052 = vrot.lane.b32.xlu0 %v1001, 127
        %v1053 = vpop.permute.xlu0 %1052
        %1054 = vrot.lane.b32.xlu0 %v1005, 127
        %v1055 = vpop.permute.xlu0 %1054
        %1056 = vrot.lane.b32.xlu0 %v1009, 127
        %v1057 = vpop.permute.xlu0 %1056
        %1058 = vrot.lane.b32.xlu0 %v1013, 127
        %v1059 = vpop.permute.xlu0 %1058
        %1060 = vrot.lane.b32.xlu0 %v1017, 127
        %v1061 = vpop.permute.xlu0 %1060
        %1062 = vrot.lane.b32.xlu0 %v1021, 127
        %v1063 = vpop.permute.xlu0 %1062
        %1064 = vrot.lane.b32.xlu0 %v1025, 127
        %v1065 = vpop.permute.xlu0 %1064
        %1066 = vrot.lane.b32.xlu0 %v1029, 127
        %v1067 = vpop.permute.xlu0 %1066
        %1068 = vrot.lane.b32.xlu0 %v1033, 127
        %v1069 = vpop.permute.xlu0 %1068
        %1070 = vrot.lane.b32.xlu0 %v1037, 127
        %v1071 = vpop.permute.xlu0 %1070
        %1072 = vrot.lane.b32.xlu0 %v1041, 127
        %v1073 = vpop.permute.xlu0 %1072
        %vm1074 = vcmask 1039360
        %v1075 = vsel %vm1074, %v1043, %v1045
        %v1076 = vsel %vm1074, %v1045, %v1047
        %v1077 = vsel %vm1074, %v1047, %v1049
        %v1078 = vsel %vm1074, %v1049, %v1051
        %v1079 = vsel %vm1074, %v1051, %v1053
        %v1080 = vsel %vm1074, %v1053, %v1055
        %v1081 = vsel %vm1074, %v1055, %v1057
        %v1082 = vsel %vm1074, %v1057, %v1059
        %v1083 = vsel %vm1074, %v1059, %v1061
        %v1084 = vsel %vm1074, %v1061, %v1063
        %v1085 = vsel %vm1074, %v1063, %v1065
        %v1086 = vsel %vm1074, %v1065, %v1067
        %v1087 = vsel %vm1074, %v1067, %v1069
        %v1088 = vsel %vm1074, %v1069, %v1071
        %v1089 = vsel %vm1074, %v1071, %v1073
        %v1106 = vsel %vm1074, %v1073, 0.0
        %v1107 = vadd.f32 %v932, %v1075
        %v1108 = vadd.f32 %v933, %v1076
        %v1109 = vadd.f32 %v934, %v1077
        %v1110 = vadd.f32 %v935, %v1078
        %v1111 = vadd.f32 %v936, %v1079
        %v1112 = vadd.f32 %v937, %v1080
        %v1113 = vadd.f32 %v938, %v1081
        %v1114 = vadd.f32 %v939, %v1082
        %v1115 = vadd.f32 %v940, %v1083
        %v1116 = vadd.f32 %v941, %v1084
        %v1117 = vadd.f32 %v942, %v1085
        %v1118 = vadd.f32 %v943, %v1086
        %v1119 = vadd.f32 %v944, %v1087
        %v1120 = vadd.f32 %v945, %v1088
        %v1121 = vadd.f32 %v946, %v1089
        %v1122 = vadd.f32 %v947, %v1106
        %s1123 = sld [smem:[#allocation6 + $0x1]]
        %s1124 = sld [smem:[#allocation3 + $0x1]]
        %v1125 = vstv %s1124
        %v1126 = vadd.f32 %v1107, %v1125
        %v1127 = vadd.f32 %v1108, %v1125
        %v1128 = vadd.f32 %v1109, %v1125
        %v1129 = vadd.f32 %v1110, %v1125
        %v1130 = vadd.f32 %v1111, %v1125
        %v1131 = vadd.f32 %v1112, %v1125
        %v1132 = vadd.f32 %v1113, %v1125
        %v1133 = vadd.f32 %v1114, %v1125
        %v1134 = vadd.f32 %v1115, %v1125
        %v1135 = vadd.f32 %v1116, %v1125
        %v1136 = vadd.f32 %v1117, %v1125
        %v1137 = vadd.f32 %v1118, %v1125
        %v1138 = vadd.f32 %v1119, %v1125
        %v1139 = vadd.f32 %v1120, %v1125
        %v1140 = vadd.f32 %v1121, %v1125
        %v1141 = vadd.f32 %v1122, %v1125
        %v1142 = vmax.f32 %v1126, 0.0
        %v1143 = vmax.f32 %v1127, 0.0
        %v1144 = vmax.f32 %v1128, 0.0
        %v1145 = vmax.f32 %v1129, 0.0
        %v1146 = vmax.f32 %v1130, 0.0
        %v1147 = vmax.f32 %v1131, 0.0
        %v1148 = vmax.f32 %v1132, 0.0
        %v1149 = vmax.f32 %v1133, 0.0
        %v1150 = vmax.f32 %v1134, 0.0
        %v1151 = vmax.f32 %v1135, 0.0
        %v1152 = vmax.f32 %v1136, 0.0
        %v1153 = vmax.f32 %v1137, 0.0
        %v1154 = vmax.f32 %v1138, 0.0
        %v1155 = vmax.f32 %v1139, 0.0
        %v1156 = vmax.f32 %v1140, 0.0
        %v1157 = vmax.f32 %v1141, 0.0
        %v1158 = vstv %s1123
        %v1159 = vmul.f32 %v1158, %v1142
        %v1160 = vmul.f32 %v1158, %v1143
        %v1161 = vmul.f32 %v1158, %v1144
        %v1162 = vmul.f32 %v1158, %v1145
        %v1163 = vmul.f32 %v1158, %v1146
        %v1164 = vmul.f32 %v1158, %v1147
        %v1165 = vmul.f32 %v1158, %v1148
        %v1166 = vmul.f32 %v1158, %v1149
        %v1167 = vmul.f32 %v1158, %v1150
        %v1168 = vmul.f32 %v1158, %v1151
        %v1169 = vmul.f32 %v1158, %v1152
        %v1170 = vmul.f32 %v1158, %v1153
        %v1171 = vmul.f32 %v1158, %v1154
        %v1172 = vmul.f32 %v1158, %v1155
        %v1173 = vmul.f32 %v1158, %v1156
        %v1174 = vmul.f32 %v1158, %v1157
        %v1191 = vcombine.low %v1159, %v1160
        %v1192 = vcombine.low %v1161, %v1162
        %v1193 = vcombine.low %v1163, %v1164
        %v1194 = vcombine.low %v1165, %v1166
        %v1196 = vunpack.c.l.s4 1966171168
        %v1197 = vunpack.c.0.s8 %v1196
        %v1198 = vlaneseq
        %v1199 = vshrl.u32 %v1198, 7
        %v1200 = vsub.s32 %v1197, %v1199
        %v1201 = vrot.slane %v1191, %v1200
        %v1203 = vunpack.c.l.s4 1966171168
        %v1204 = vunpack.c.0.s8 %v1203
        %v1205 = vlaneseq
        %v1206 = vshrl.u32 %v1205, 7
        %v1207 = vsub.s32 %v1204, %v1206
        %v1208 = vrot.slane %v1192, %v1207
        %v1210 = vunpack.c.l.s4 1966171168
        %v1211 = vunpack.c.0.s8 %v1210
        %v1212 = vlaneseq
        %v1213 = vshrl.u32 %v1212, 7
        %v1214 = vsub.s32 %v1211, %v1213
        %v1215 = vrot.slane %v1193, %v1214
        %v1217 = vunpack.c.l.s4 1966171168
        %v1218 = vunpack.c.0.s8 %v1217
        %v1219 = vlaneseq
        %v1220 = vshrl.u32 %v1219, 7
        %v1221 = vsub.s32 %v1218, %v1220
        %v1222 = vrot.slane %v1194, %v1221
        %v1223 = vcombine.low %v1201, %v1208
        %v1224 = vcombine.low %v1215, %v1222
        %v1226 = vunpack.c.l.s4 1966171168
        %v1227 = vunpack.c.0.s8 %v1226
        %v1228 = vlaneseq
        %v1229 = vshrl.u32 %v1228, 7
        %v1230 = vsub.s32 %v1227, %v1229
        %v1231 = vrot.slane %v1223, %v1230
        %v1233 = vunpack.c.l.s4 1966171168
        %v1234 = vunpack.c.0.s8 %v1233
        %v1235 = vlaneseq
        %v1236 = vshrl.u32 %v1235, 7
        %v1237 = vsub.s32 %v1234, %v1236
        %v1238 = vrot.slane %v1224, %v1237
        %v1239 = vcombine.low %v1231, %v1238
        %v1240 = vcombine.low %v1167, %v1168
        %v1241 = vcombine.low %v1169, %v1170
        %v1242 = vcombine.low %v1171, %v1172
        %v1243 = vcombine.low %v1173, %v1174
        %v1245 = vunpack.c.l.s4 1966171168
        %v1246 = vunpack.c.0.s8 %v1245
        %v1247 = vlaneseq
        %v1248 = vshrl.u32 %v1247, 7
        %v1249 = vsub.s32 %v1246, %v1248
        %v1250 = vrot.slane %v1240, %v1249
        %v1252 = vunpack.c.l.s4 1966171168
        %v1253 = vunpack.c.0.s8 %v1252
        %v1254 = vlaneseq
        %v1255 = vshrl.u32 %v1254, 7
        %v1256 = vsub.s32 %v1253, %v1255
        %v1257 = vrot.slane %v1241, %v1256
        %v1259 = vunpack.c.l.s4 1966171168
        %v1260 = vunpack.c.0.s8 %v1259
        %v1261 = vlaneseq
        %v1262 = vshrl.u32 %v1261, 7
        %v1263 = vsub.s32 %v1260, %v1262
        %v1264 = vrot.slane %v1242, %v1263
        %v1266 = vunpack.c.l.s4 1966171168
        %v1267 = vunpack.c.0.s8 %v1266
        %v1268 = vlaneseq
        %v1269 = vshrl.u32 %v1268, 7
        %v1270 = vsub.s32 %v1267, %v1269
        %v1271 = vrot.slane %v1243, %v1270
        %v1272 = vcombine.low %v1250, %v1257
        %v1273 = vcombine.low %v1264, %v1271
        %v1275 = vunpack.c.l.s4 1966171168
        %v1276 = vunpack.c.0.s8 %v1275
        %v1277 = vlaneseq
        %v1278 = vshrl.u32 %v1277, 7
        %v1279 = vsub.s32 %v1276, %v1278
        %v1280 = vrot.slane %v1272, %v1279
        %v1282 = vunpack.c.l.s4 1966171168
        %v1283 = vunpack.c.0.s8 %v1282
        %v1284 = vlaneseq
        %v1285 = vshrl.u32 %v1284, 7
        %v1286 = vsub.s32 %v1283, %v1285
        %v1287 = vrot.slane %v1273, %v1286
        %v1288 = vcombine.low %v1280, %v1287
        %v1291 = vadd.f32 %v661, %v1239
        %v1292 = vadd.f32 %v662, %v1288
        %s1293 = scalar_lea.vmem [#allocation2], 186
        %v1294 = vld [vmem:[%s1293] ss:$8 sm:$0xf]
        %v1295 = vld [vmem:[%s1293] ss:$8 sm:$0xf0]
        %v1296 = vor.u32 %v1294, %v1295
        %s1297 = scalar_lea.vmem [#allocation2], 250
        %v1298 = vld [vmem:[%s1297] ss:$8 sm:$0xf]
        %v1299 = vld [vmem:[%s1297] ss:$8 sm:$0xf0]
        %v1300 = vor.u32 %v1298, %v1299
        %s1301 = scalar_lea.vmem [#allocation2], 205
        %v1302 = vld [vmem:[%s1301] ss:$8 sm:$0xf]
        %v1303 = vld [vmem:[%s1301] ss:$8 sm:$0xf0]
        %v1304 = vor.u32 %v1302, %v1303
        %s1305 = scalar_lea.vmem [#allocation2], 269
        %v1306 = vld [vmem:[%s1305] ss:$8 sm:$0xf]
        %v1307 = vld [vmem:[%s1305] ss:$8 sm:$0xf0]
        %v1308 = vor.u32 %v1306, %v1307
        %v1309 = vadd.f32 %v1296, %v1304
        %v1310 = vadd.f32 %v1300, %v1308
        %s1311 = scalar_lea.vmem [#allocation2], 392
        %v1312 = vld [vmem:[%s1311] ss:$8 sm:$0xf]
        %v1313 = vld [vmem:[%s1311] ss:$8 sm:$0xf0]
        %v1314 = vor.u32 %v1312, %v1313
        %s1315 = scalar_lea.vmem [#allocation2], 456
        %v1316 = vld [vmem:[%s1315] ss:$8 sm:$0xf]
        %v1317 = vld [vmem:[%s1315] ss:$8 sm:$0xf0]
        %v1318 = vor.u32 %v1316, %v1317
        %v1319 = vadd.f32 %v1309, %v1314
        %v1320 = vadd.f32 %v1310, %v1318
        %v1323 = vlaneseq
        %v1324 = vshrl.u32 %v1323, 7
        %v1325 = vsub.s32 0, %v1324
        %v1326 = vrot.slane %v1319, %v1325
        %v1327 = vlaneseq
        %v1328 = vshrl.u32 %v1327, 7
        %v1329 = vsub.s32 1, %v1328
        %v1330 = vrot.slane %v1319, %v1329
        %v1331 = vlaneseq
        %v1332 = vshrl.u32 %v1331, 7
        %v1333 = vsub.s32 2, %v1332
        %v1334 = vrot.slane %v1319, %v1333
        %v1335 = vlaneseq
        %v1336 = vshrl.u32 %v1335, 7
        %v1337 = vsub.s32 3, %v1336
        %v1338 = vrot.slane %v1319, %v1337
        %v1339 = vlaneseq
        %v1340 = vshrl.u32 %v1339, 7
        %v1341 = vsub.s32 4, %v1340
        %v1342 = vrot.slane %v1319, %v1341
        %v1343 = vlaneseq
        %v1344 = vshrl.u32 %v1343, 7
        %v1345 = vsub.s32 5, %v1344
        %v1346 = vrot.slane %v1319, %v1345
        %v1347 = vlaneseq
        %v1348 = vshrl.u32 %v1347, 7
        %v1349 = vsub.s32 6, %v1348
        %v1350 = vrot.slane %v1319, %v1349
        %v1351 = vlaneseq
        %v1352 = vshrl.u32 %v1351, 7
        %v1353 = vsub.s32 7, %v1352
        %v1354 = vrot.slane %v1319, %v1353
        %v1355 = vlaneseq
        %v1356 = vshrl.u32 %v1355, 7
        %v1357 = vsub.s32 0, %v1356
        %v1358 = vrot.slane %v1320, %v1357
        %v1359 = vlaneseq
        %v1360 = vshrl.u32 %v1359, 7
        %v1361 = vsub.s32 1, %v1360
        %v1362 = vrot.slane %v1320, %v1361
        %v1363 = vlaneseq
        %v1364 = vshrl.u32 %v1363, 7
        %v1365 = vsub.s32 2, %v1364
        %v1366 = vrot.slane %v1320, %v1365
        %v1367 = vlaneseq
        %v1368 = vshrl.u32 %v1367, 7
        %v1369 = vsub.s32 3, %v1368
        %v1370 = vrot.slane %v1320, %v1369
        %v1371 = vlaneseq
        %v1372 = vshrl.u32 %v1371, 7
        %v1373 = vsub.s32 4, %v1372
        %v1374 = vrot.slane %v1320, %v1373
        %v1375 = vlaneseq
        %v1376 = vshrl.u32 %v1375, 7
        %v1377 = vsub.s32 5, %v1376
        %v1378 = vrot.slane %v1320, %v1377
        %v1379 = vlaneseq
        %v1380 = vshrl.u32 %v1379, 7
        %v1381 = vsub.s32 6, %v1380
        %v1382 = vrot.slane %v1320, %v1381
        %v1383 = vlaneseq
        %v1384 = vshrl.u32 %v1383, 7
        %v1385 = vsub.s32 7, %v1384
        %v1386 = vrot.slane %v1320, %v1385
        %1387 = vrot.lane.b32.xlu0 %v1326, 2
        %v1388 = vpop.permute.xlu0 %1387
        %1389 = vrot.lane.b32.xlu0 %v1330, 2
        %v1390 = vpop.permute.xlu0 %1389
        %1391 = vrot.lane.b32.xlu0 %v1334, 2
        %v1392 = vpop.permute.xlu0 %1391
        %1393 = vrot.lane.b32.xlu0 %v1338, 2
        %v1394 = vpop.permute.xlu0 %1393
        %1395 = vrot.lane.b32.xlu0 %v1342, 2
        %v1396 = vpop.permute.xlu0 %1395
        %1397 = vrot.lane.b32.xlu0 %v1346, 2
        %v1398 = vpop.permute.xlu0 %1397
        %1399 = vrot.lane.b32.xlu0 %v1350, 2
        %v1400 = vpop.permute.xlu0 %1399
        %1401 = vrot.lane.b32.xlu0 %v1354, 2
        %v1402 = vpop.permute.xlu0 %1401
        %1403 = vrot.lane.b32.xlu0 %v1358, 2
        %v1404 = vpop.permute.xlu0 %1403
        %1405 = vrot.lane.b32.xlu0 %v1362, 2
        %v1406 = vpop.permute.xlu0 %1405
        %1407 = vrot.lane.b32.xlu0 %v1366, 2
        %v1408 = vpop.permute.xlu0 %1407
        %1409 = vrot.lane.b32.xlu0 %v1370, 2
        %v1410 = vpop.permute.xlu0 %1409
        %1411 = vrot.lane.b32.xlu0 %v1374, 2
        %v1412 = vpop.permute.xlu0 %1411
        %1413 = vrot.lane.b32.xlu0 %v1378, 2
        %v1414 = vpop.permute.xlu0 %1413
        %1415 = vrot.lane.b32.xlu0 %v1382, 2
        %v1416 = vpop.permute.xlu0 %1415
        %1417 = vrot.lane.b32.xlu0 %v1386, 2
        %v1418 = vpop.permute.xlu0 %1417
        %vm1419 = vcmask 15360
        %v1420 = vsel %vm1419, %v1388, %v1390
        %v1421 = vsel %vm1419, %v1390, %v1392
        %v1422 = vsel %vm1419, %v1392, %v1394
        %v1423 = vsel %vm1419, %v1394, %v1396
        %v1424 = vsel %vm1419, %v1396, %v1398
        %v1425 = vsel %vm1419, %v1398, %v1400
        %v1426 = vsel %vm1419, %v1400, %v1402
        %v1427 = vsel %vm1419, %v1402, %v1404
        %v1428 = vsel %vm1419, %v1404, %v1406
        %v1429 = vsel %vm1419, %v1406, %v1408
        %v1430 = vsel %vm1419, %v1408, %v1410
        %v1431 = vsel %vm1419, %v1410, %v1412
        %v1432 = vsel %vm1419, %v1412, %v1414
        %v1433 = vsel %vm1419, %v1414, %v1416
        %v1434 = vsel %vm1419, %v1416, %v1418
        %v1451 = vsel %vm1419, 0.0, %v1388
        %s1452 = scalar_lea.vmem [#allocation2], 187
        %v1453 = vld [vmem:[%s1452] ss:$8 sm:$0xf]
        %v1454 = vld [vmem:[%s1452] ss:$8 sm:$0xf0]
        %v1455 = vor.u32 %v1453, %v1454
        %s1456 = scalar_lea.vmem [#allocation2], 251
        %v1457 = vld [vmem:[%s1456] ss:$8 sm:$0xf]
        %v1458 = vld [vmem:[%s1456] ss:$8 sm:$0xf0]
        %v1459 = vor.u32 %v1457, %v1458
        %s1460 = scalar_lea.vmem [#allocation2], 206
        %v1461 = vld [vmem:[%s1460] ss:$8 sm:$0xf]
        %v1462 = vld [vmem:[%s1460] ss:$8 sm:$0xf0]
        %v1463 = vor.u32 %v1461, %v1462
        %s1464 = scalar_lea.vmem [#allocation2], 270
        %v1465 = vld [vmem:[%s1464] ss:$8 sm:$0xf]
        %v1466 = vld [vmem:[%s1464] ss:$8 sm:$0xf0]
        %v1467 = vor.u32 %v1465, %v1466
        %v1468 = vadd.f32 %v1455, %v1463
        %v1469 = vadd.f32 %v1459, %v1467
        %s1470 = scalar_lea.vmem [#allocation2], 393
        %v1471 = vld [vmem:[%s1470] ss:$8 sm:$0xf]
        %v1472 = vld [vmem:[%s1470] ss:$8 sm:$0xf0]
        %v1473 = vor.u32 %v1471, %v1472
        %s1474 = scalar_lea.vmem [#allocation2], 457
        %v1475 = vld [vmem:[%s1474] ss:$8 sm:$0xf]
        %v1476 = vld [vmem:[%s1474] ss:$8 sm:$0xf0]
        %v1477 = vor.u32 %v1475, %v1476
        %v1478 = vadd.f32 %v1468, %v1473
        %v1479 = vadd.f32 %v1469, %v1477
        %v1482 = vlaneseq
        %v1483 = vshrl.u32 %v1482, 7
        %v1484 = vsub.s32 0, %v1483
        %v1485 = vrot.slane %v1478, %v1484
        %v1486 = vlaneseq
        %v1487 = vshrl.u32 %v1486, 7
        %v1488 = vsub.s32 1, %v1487
        %v1489 = vrot.slane %v1478, %v1488
        %v1490 = vlaneseq
        %v1491 = vshrl.u32 %v1490, 7
        %v1492 = vsub.s32 2, %v1491
        %v1493 = vrot.slane %v1478, %v1492
        %v1494 = vlaneseq
        %v1495 = vshrl.u32 %v1494, 7
        %v1496 = vsub.s32 3, %v1495
        %v1497 = vrot.slane %v1478, %v1496
        %v1498 = vlaneseq
        %v1499 = vshrl.u32 %v1498, 7
        %v1500 = vsub.s32 4, %v1499
        %v1501 = vrot.slane %v1478, %v1500
        %v1502 = vlaneseq
        %v1503 = vshrl.u32 %v1502, 7
        %v1504 = vsub.s32 5, %v1503
        %v1505 = vrot.slane %v1478, %v1504
        %v1506 = vlaneseq
        %v1507 = vshrl.u32 %v1506, 7
        %v1508 = vsub.s32 6, %v1507
        %v1509 = vrot.slane %v1478, %v1508
        %v1510 = vlaneseq
        %v1511 = vshrl.u32 %v1510, 7
        %v1512 = vsub.s32 7, %v1511
        %v1513 = vrot.slane %v1478, %v1512
        %v1514 = vlaneseq
        %v1515 = vshrl.u32 %v1514, 7
        %v1516 = vsub.s32 0, %v1515
        %v1517 = vrot.slane %v1479, %v1516
        %v1518 = vlaneseq
        %v1519 = vshrl.u32 %v1518, 7
        %v1520 = vsub.s32 1, %v1519
        %v1521 = vrot.slane %v1479, %v1520
        %v1522 = vlaneseq
        %v1523 = vshrl.u32 %v1522, 7
        %v1524 = vsub.s32 2, %v1523
        %v1525 = vrot.slane %v1479, %v1524
        %v1526 = vlaneseq
        %v1527 = vshrl.u32 %v1526, 7
        %v1528 = vsub.s32 3, %v1527
        %v1529 = vrot.slane %v1479, %v1528
        %v1530 = vlaneseq
        %v1531 = vshrl.u32 %v1530, 7
        %v1532 = vsub.s32 4, %v1531
        %v1533 = vrot.slane %v1479, %v1532
        %v1534 = vlaneseq
        %v1535 = vshrl.u32 %v1534, 7
        %v1536 = vsub.s32 5, %v1535
        %v1537 = vrot.slane %v1479, %v1536
        %v1538 = vlaneseq
        %v1539 = vshrl.u32 %v1538, 7
        %v1540 = vsub.s32 6, %v1539
        %v1541 = vrot.slane %v1479, %v1540
        %v1542 = vlaneseq
        %v1543 = vshrl.u32 %v1542, 7
        %v1544 = vsub.s32 7, %v1543
        %v1545 = vrot.slane %v1479, %v1544
        %v1562 = vadd.f32 %v1451, %v1485
        %v1563 = vadd.f32 %v1420, %v1489
        %v1564 = vadd.f32 %v1421, %v1493
        %v1565 = vadd.f32 %v1422, %v1497
        %v1566 = vadd.f32 %v1423, %v1501
        %v1567 = vadd.f32 %v1424, %v1505
        %v1568 = vadd.f32 %v1425, %v1509
        %v1569 = vadd.f32 %v1426, %v1513
        %v1570 = vadd.f32 %v1427, %v1517
        %v1571 = vadd.f32 %v1428, %v1521
        %v1572 = vadd.f32 %v1429, %v1525
        %v1573 = vadd.f32 %v1430, %v1529
        %v1574 = vadd.f32 %v1431, %v1533
        %v1575 = vadd.f32 %v1432, %v1537
        %v1576 = vadd.f32 %v1433, %v1541
        %v1577 = vadd.f32 %v1434, %v1545
        %s1578 = scalar_lea.vmem [#allocation2], 188
        %v1579 = vld [vmem:[%s1578] ss:$8 sm:$0xf]
        %v1580 = vld [vmem:[%s1578] ss:$8 sm:$0xf0]
        %v1581 = vor.u32 %v1579, %v1580
        %s1582 = scalar_lea.vmem [#allocation2], 252
        %v1583 = vld [vmem:[%s1582] ss:$8 sm:$0xf]
        %v1584 = vld [vmem:[%s1582] ss:$8 sm:$0xf0]
        %v1585 = vor.u32 %v1583, %v1584
        %s1586 = scalar_lea.vmem [#allocation2], 207
        %v1587 = vld [vmem:[%s1586] ss:$8 sm:$0xf]
        %v1588 = vld [vmem:[%s1586] ss:$8 sm:$0xf0]
        %v1589 = vor.u32 %v1587, %v1588
        %s1590 = scalar_lea.vmem [#allocation2], 271
        %v1591 = vld [vmem:[%s1590] ss:$8 sm:$0xf]
        %v1592 = vld [vmem:[%s1590] ss:$8 sm:$0xf0]
        %v1593 = vor.u32 %v1591, %v1592
        %v1594 = vadd.f32 %v1581, %v1589
        %v1595 = vadd.f32 %v1585, %v1593
        %s1596 = scalar_lea.vmem [#allocation2], 394
        %v1597 = vld [vmem:[%s1596] ss:$8 sm:$0xf]
        %v1598 = vld [vmem:[%s1596] ss:$8 sm:$0xf0]
        %v1599 = vor.u32 %v1597, %v1598
        %s1600 = scalar_lea.vmem [#allocation2], 458
        %v1601 = vld [vmem:[%s1600] ss:$8 sm:$0xf]
        %v1602 = vld [vmem:[%s1600] ss:$8 sm:$0xf0]
        %v1603 = vor.u32 %v1601, %v1602
        %v1604 = vadd.f32 %v1594, %v1599
        %v1605 = vadd.f32 %v1595, %v1603
        %v1608 = vlaneseq
        %v1609 = vshrl.u32 %v1608, 7
        %v1610 = vsub.s32 0, %v1609
        %v1611 = vrot.slane %v1604, %v1610
        %v1612 = vlaneseq
        %v1613 = vshrl.u32 %v1612, 7
        %v1614 = vsub.s32 1, %v1613
        %v1615 = vrot.slane %v1604, %v1614
        %v1616 = vlaneseq
        %v1617 = vshrl.u32 %v1616, 7
        %v1618 = vsub.s32 2, %v1617
        %v1619 = vrot.slane %v1604, %v1618
        %v1620 = vlaneseq
        %v1621 = vshrl.u32 %v1620, 7
        %v1622 = vsub.s32 3, %v1621
        %v1623 = vrot.slane %v1604, %v1622
        %v1624 = vlaneseq
        %v1625 = vshrl.u32 %v1624, 7
        %v1626 = vsub.s32 4, %v1625
        %v1627 = vrot.slane %v1604, %v1626
        %v1628 = vlaneseq
        %v1629 = vshrl.u32 %v1628, 7
        %v1630 = vsub.s32 5, %v1629
        %v1631 = vrot.slane %v1604, %v1630
        %v1632 = vlaneseq
        %v1633 = vshrl.u32 %v1632, 7
        %v1634 = vsub.s32 6, %v1633
        %v1635 = vrot.slane %v1604, %v1634
        %v1636 = vlaneseq
        %v1637 = vshrl.u32 %v1636, 7
        %v1638 = vsub.s32 7, %v1637
        %v1639 = vrot.slane %v1604, %v1638
        %v1640 = vlaneseq
        %v1641 = vshrl.u32 %v1640, 7
        %v1642 = vsub.s32 0, %v1641
        %v1643 = vrot.slane %v1605, %v1642
        %v1644 = vlaneseq
        %v1645 = vshrl.u32 %v1644, 7
        %v1646 = vsub.s32 1, %v1645
        %v1647 = vrot.slane %v1605, %v1646
        %v1648 = vlaneseq
        %v1649 = vshrl.u32 %v1648, 7
        %v1650 = vsub.s32 2, %v1649
        %v1651 = vrot.slane %v1605, %v1650
        %v1652 = vlaneseq
        %v1653 = vshrl.u32 %v1652, 7
        %v1654 = vsub.s32 3, %v1653
        %v1655 = vrot.slane %v1605, %v1654
        %v1656 = vlaneseq
        %v1657 = vshrl.u32 %v1656, 7
        %v1658 = vsub.s32 4, %v1657
        %v1659 = vrot.slane %v1605, %v1658
        %v1660 = vlaneseq
        %v1661 = vshrl.u32 %v1660, 7
        %v1662 = vsub.s32 5, %v1661
        %v1663 = vrot.slane %v1605, %v1662
        %v1664 = vlaneseq
        %v1665 = vshrl.u32 %v1664, 7
        %v1666 = vsub.s32 6, %v1665
        %v1667 = vrot.slane %v1605, %v1666
        %v1668 = vlaneseq
        %v1669 = vshrl.u32 %v1668, 7
        %v1670 = vsub.s32 7, %v1669
        %v1671 = vrot.slane %v1605, %v1670
        %1672 = vrot.lane.b32.xlu0 %v1611, 126
        %v1673 = vpop.permute.xlu0 %1672
        %1674 = vrot.lane.b32.xlu0 %v1615, 126
        %v1675 = vpop.permute.xlu0 %1674
        %1676 = vrot.lane.b32.xlu0 %v1619, 126
        %v1677 = vpop.permute.xlu0 %1676
        %1678 = vrot.lane.b32.xlu0 %v1623, 126
        %v1679 = vpop.permute.xlu0 %1678
        %1680 = vrot.lane.b32.xlu0 %v1627, 126
        %v1681 = vpop.permute.xlu0 %1680
        %1682 = vrot.lane.b32.xlu0 %v1631, 126
        %v1683 = vpop.permute.xlu0 %1682
        %1684 = vrot.lane.b32.xlu0 %v1635, 126
        %v1685 = vpop.permute.xlu0 %1684
        %1686 = vrot.lane.b32.xlu0 %v1639, 126
        %v1687 = vpop.permute.xlu0 %1686
        %1688 = vrot.lane.b32.xlu0 %v1643, 126
        %v1689 = vpop.permute.xlu0 %1688
        %1690 = vrot.lane.b32.xlu0 %v1647, 126
        %v1691 = vpop.permute.xlu0 %1690
        %1692 = vrot.lane.b32.xlu0 %v1651, 126
        %v1693 = vpop.permute.xlu0 %1692
        %1694 = vrot.lane.b32.xlu0 %v1655, 126
        %v1695 = vpop.permute.xlu0 %1694
        %1696 = vrot.lane.b32.xlu0 %v1659, 126
        %v1697 = vpop.permute.xlu0 %1696
        %1698 = vrot.lane.b32.xlu0 %v1663, 126
        %v1699 = vpop.permute.xlu0 %1698
        %1700 = vrot.lane.b32.xlu0 %v1667, 126
        %v1701 = vpop.permute.xlu0 %1700
        %1702 = vrot.lane.b32.xlu0 %v1671, 126
        %v1703 = vpop.permute.xlu0 %1702
        %vm1704 = vcmask 1031168
        %v1705 = vsel %vm1704, %v1673, %v1675
        %v1706 = vsel %vm1704, %v1675, %v1677
        %v1707 = vsel %vm1704, %v1677, %v1679
        %v1708 = vsel %vm1704, %v1679, %v1681
        %v1709 = vsel %vm1704, %v1681, %v1683
        %v1710 = vsel %vm1704, %v1683, %v1685
        %v1711 = vsel %vm1704, %v1685, %v1687
        %v1712 = vsel %vm1704, %v1687, %v1689
        %v1713 = vsel %vm1704, %v1689, %v1691
        %v1714 = vsel %vm1704, %v1691, %v1693
        %v1715 = vsel %vm1704, %v1693, %v1695
        %v1716 = vsel %vm1704, %v1695, %v1697
        %v1717 = vsel %vm1704, %v1697, %v1699
        %v1718 = vsel %vm1704, %v1699, %v1701
        %v1719 = vsel %vm1704, %v1701, %v1703
        %v1736 = vsel %vm1704, %v1703, 0.0
        %v1737 = vadd.f32 %v1562, %v1705
        %v1738 = vadd.f32 %v1563, %v1706
        %v1739 = vadd.f32 %v1564, %v1707
        %v1740 = vadd.f32 %v1565, %v1708
        %v1741 = vadd.f32 %v1566, %v1709
        %v1742 = vadd.f32 %v1567, %v1710
        %v1743 = vadd.f32 %v1568, %v1711
        %v1744 = vadd.f32 %v1569, %v1712
        %v1745 = vadd.f32 %v1570, %v1713
        %v1746 = vadd.f32 %v1571, %v1714
        %v1747 = vadd.f32 %v1572, %v1715
        %v1748 = vadd.f32 %v1573, %v1716
        %v1749 = vadd.f32 %v1574, %v1717
        %v1750 = vadd.f32 %v1575, %v1718
        %v1751 = vadd.f32 %v1576, %v1719
        %v1752 = vadd.f32 %v1577, %v1736
        %s1753 = sld [smem:[#allocation6 + $0x2]]
        %s1754 = sld [smem:[#allocation3 + $0x2]]
        %v1755 = vstv %s1754
        %v1756 = vadd.f32 %v1737, %v1755
        %v1757 = vadd.f32 %v1738, %v1755
        %v1758 = vadd.f32 %v1739, %v1755
        %v1759 = vadd.f32 %v1740, %v1755
        %v1760 = vadd.f32 %v1741, %v1755
        %v1761 = vadd.f32 %v1742, %v1755
        %v1762 = vadd.f32 %v1743, %v1755
        %v1763 = vadd.f32 %v1744, %v1755
        %v1764 = vadd.f32 %v1745, %v1755
        %v1765 = vadd.f32 %v1746, %v1755
        %v1766 = vadd.f32 %v1747, %v1755
        %v1767 = vadd.f32 %v1748, %v1755
        %v1768 = vadd.f32 %v1749, %v1755
        %v1769 = vadd.f32 %v1750, %v1755
        %v1770 = vadd.f32 %v1751, %v1755
        %v1771 = vadd.f32 %v1752, %v1755
        %v1772 = vmax.f32 %v1756, 0.0
        %v1773 = vmax.f32 %v1757, 0.0
        %v1774 = vmax.f32 %v1758, 0.0
        %v1775 = vmax.f32 %v1759, 0.0
        %v1776 = vmax.f32 %v1760, 0.0
        %v1777 = vmax.f32 %v1761, 0.0
        %v1778 = vmax.f32 %v1762, 0.0
        %v1779 = vmax.f32 %v1763, 0.0
        %v1780 = vmax.f32 %v1764, 0.0
        %v1781 = vmax.f32 %v1765, 0.0
        %v1782 = vmax.f32 %v1766, 0.0
        %v1783 = vmax.f32 %v1767, 0.0
        %v1784 = vmax.f32 %v1768, 0.0
        %v1785 = vmax.f32 %v1769, 0.0
        %v1786 = vmax.f32 %v1770, 0.0
        %v1787 = vmax.f32 %v1771, 0.0
        %v1788 = vstv %s1753
        %v1789 = vmul.f32 %v1788, %v1772
        %v1790 = vmul.f32 %v1788, %v1773
        %v1791 = vmul.f32 %v1788, %v1774
        %v1792 = vmul.f32 %v1788, %v1775
        %v1793 = vmul.f32 %v1788, %v1776
        %v1794 = vmul.f32 %v1788, %v1777
        %v1795 = vmul.f32 %v1788, %v1778
        %v1796 = vmul.f32 %v1788, %v1779
        %v1797 = vmul.f32 %v1788, %v1780
        %v1798 = vmul.f32 %v1788, %v1781
        %v1799 = vmul.f32 %v1788, %v1782
        %v1800 = vmul.f32 %v1788, %v1783
        %v1801 = vmul.f32 %v1788, %v1784
        %v1802 = vmul.f32 %v1788, %v1785
        %v1803 = vmul.f32 %v1788, %v1786
        %v1804 = vmul.f32 %v1788, %v1787
        %v1821 = vcombine.low %v1789, %v1790
        %v1822 = vcombine.low %v1791, %v1792
        %v1823 = vcombine.low %v1793, %v1794
        %v1824 = vcombine.low %v1795, %v1796
        %v1826 = vunpack.c.l.s4 1966171168
        %v1827 = vunpack.c.0.s8 %v1826
        %v1828 = vlaneseq
        %v1829 = vshrl.u32 %v1828, 7
        %v1830 = vsub.s32 %v1827, %v1829
        %v1831 = vrot.slane %v1821, %v1830
        %v1833 = vunpack.c.l.s4 1966171168
        %v1834 = vunpack.c.0.s8 %v1833
        %v1835 = vlaneseq
        %v1836 = vshrl.u32 %v1835, 7
        %v1837 = vsub.s32 %v1834, %v1836
        %v1838 = vrot.slane %v1822, %v1837
        %v1840 = vunpack.c.l.s4 1966171168
        %v1841 = vunpack.c.0.s8 %v1840
        %v1842 = vlaneseq
        %v1843 = vshrl.u32 %v1842, 7
        %v1844 = vsub.s32 %v1841, %v1843
        %v1845 = vrot.slane %v1823, %v1844
        %v1847 = vunpack.c.l.s4 1966171168
        %v1848 = vunpack.c.0.s8 %v1847
        %v1849 = vlaneseq
        %v1850 = vshrl.u32 %v1849, 7
        %v1851 = vsub.s32 %v1848, %v1850
        %v1852 = vrot.slane %v1824, %v1851
        %v1853 = vcombine.low %v1831, %v1838
        %v1854 = vcombine.low %v1845, %v1852
        %v1856 = vunpack.c.l.s4 1966171168
        %v1857 = vunpack.c.0.s8 %v1856
        %v1858 = vlaneseq
        %v1859 = vshrl.u32 %v1858, 7
        %v1860 = vsub.s32 %v1857, %v1859
        %v1861 = vrot.slane %v1853, %v1860
        %v1863 = vunpack.c.l.s4 1966171168
        %v1864 = vunpack.c.0.s8 %v1863
        %v1865 = vlaneseq
        %v1866 = vshrl.u32 %v1865, 7
        %v1867 = vsub.s32 %v1864, %v1866
        %v1868 = vrot.slane %v1854, %v1867
        %v1869 = vcombine.low %v1861, %v1868
        %v1870 = vcombine.low %v1797, %v1798
        %v1871 = vcombine.low %v1799, %v1800
        %v1872 = vcombine.low %v1801, %v1802
        %v1873 = vcombine.low %v1803, %v1804
        %v1875 = vunpack.c.l.s4 1966171168
        %v1876 = vunpack.c.0.s8 %v1875
        %v1877 = vlaneseq
        %v1878 = vshrl.u32 %v1877, 7
        %v1879 = vsub.s32 %v1876, %v1878
        %v1880 = vrot.slane %v1870, %v1879
        %v1882 = vunpack.c.l.s4 1966171168
        %v1883 = vunpack.c.0.s8 %v1882
        %v1884 = vlaneseq
        %v1885 = vshrl.u32 %v1884, 7
        %v1886 = vsub.s32 %v1883, %v1885
        %v1887 = vrot.slane %v1871, %v1886
        %v1889 = vunpack.c.l.s4 1966171168
        %v1890 = vunpack.c.0.s8 %v1889
        %v1891 = vlaneseq
        %v1892 = vshrl.u32 %v1891, 7
        %v1893 = vsub.s32 %v1890, %v1892
        %v1894 = vrot.slane %v1872, %v1893
        %v1896 = vunpack.c.l.s4 1966171168
        %v1897 = vunpack.c.0.s8 %v1896
        %v1898 = vlaneseq
        %v1899 = vshrl.u32 %v1898, 7
        %v1900 = vsub.s32 %v1897, %v1899
        %v1901 = vrot.slane %v1873, %v1900
        %v1902 = vcombine.low %v1880, %v1887
        %v1903 = vcombine.low %v1894, %v1901
        %v1905 = vunpack.c.l.s4 1966171168
        %v1906 = vunpack.c.0.s8 %v1905
        %v1907 = vlaneseq
        %v1908 = vshrl.u32 %v1907, 7
        %v1909 = vsub.s32 %v1906, %v1908
        %v1910 = vrot.slane %v1902, %v1909
        %v1912 = vunpack.c.l.s4 1966171168
        %v1913 = vunpack.c.0.s8 %v1912
        %v1914 = vlaneseq
        %v1915 = vshrl.u32 %v1914, 7
        %v1916 = vsub.s32 %v1913, %v1915
        %v1917 = vrot.slane %v1903, %v1916
        %v1918 = vcombine.low %v1910, %v1917
        %v1921 = vadd.f32 %v1291, %v1869
        %v1922 = vadd.f32 %v1292, %v1918
        %s1923 = scalar_lea.vmem [#allocation2], 355
        %v1924 = vld [vmem:[%s1923] ss:$8 sm:$0xf]
        %v1925 = vld [vmem:[%s1923] ss:$8 sm:$0xf0]
        %v1926 = vor.u32 %v1924, %v1925
        %s1927 = scalar_lea.vmem [#allocation2], 419
        %v1928 = vld [vmem:[%s1927] ss:$8 sm:$0xf]
        %v1929 = vld [vmem:[%s1927] ss:$8 sm:$0xf0]
        %v1930 = vor.u32 %v1928, %v1929
        %s1931 = scalar_lea.vmem [#allocation2], 382
        %v1932 = vld [vmem:[%s1931] ss:$8 sm:$0xf]
        %v1933 = vld [vmem:[%s1931] ss:$8 sm:$0xf0]
        %v1934 = vor.u32 %v1932, %v1933
        %s1935 = scalar_lea.vmem [#allocation2], 446
        %v1936 = vld [vmem:[%s1935] ss:$8 sm:$0xf]
        %v1937 = vld [vmem:[%s1935] ss:$8 sm:$0xf0]
        %v1938 = vor.u32 %v1936, %v1937
        %v1939 = vadd.f32 %v1926, %v1934
        %v1940 = vadd.f32 %v1930, %v1938
        %s1941 = scalar_lea.vmem [#allocation2], 577
        %v1942 = vld [vmem:[%s1941] ss:$8 sm:$0xf]
        %v1943 = vld [vmem:[%s1941] ss:$8 sm:$0xf0]
        %v1944 = vor.u32 %v1942, %v1943
        %s1945 = scalar_lea.vmem [#allocation2], 641
        %v1946 = vld [vmem:[%s1945] ss:$8 sm:$0xf]
        %v1947 = vld [vmem:[%s1945] ss:$8 sm:$0xf0]
        %v1948 = vor.u32 %v1946, %v1947
        %v1949 = vadd.f32 %v1939, %v1944
        %v1950 = vadd.f32 %v1940, %v1948
        %v1953 = vlaneseq
        %v1954 = vshrl.u32 %v1953, 7
        %v1955 = vsub.s32 0, %v1954
        %v1956 = vrot.slane %v1949, %v1955
        %v1957 = vlaneseq
        %v1958 = vshrl.u32 %v1957, 7
        %v1959 = vsub.s32 1, %v1958
        %v1960 = vrot.slane %v1949, %v1959
        %v1961 = vlaneseq
        %v1962 = vshrl.u32 %v1961, 7
        %v1963 = vsub.s32 2, %v1962
        %v1964 = vrot.slane %v1949, %v1963
        %v1965 = vlaneseq
        %v1966 = vshrl.u32 %v1965, 7
        %v1967 = vsub.s32 3, %v1966
        %v1968 = vrot.slane %v1949, %v1967
        %v1969 = vlaneseq
        %v1970 = vshrl.u32 %v1969, 7
        %v1971 = vsub.s32 4, %v1970
        %v1972 = vrot.slane %v1949, %v1971
        %v1973 = vlaneseq
        %v1974 = vshrl.u32 %v1973, 7
        %v1975 = vsub.s32 5, %v1974
        %v1976 = vrot.slane %v1949, %v1975
        %v1977 = vlaneseq
        %v1978 = vshrl.u32 %v1977, 7
        %v1979 = vsub.s32 6, %v1978
        %v1980 = vrot.slane %v1949, %v1979
        %v1981 = vlaneseq
        %v1982 = vshrl.u32 %v1981, 7
        %v1983 = vsub.s32 7, %v1982
        %v1984 = vrot.slane %v1949, %v1983
        %v1985 = vlaneseq
        %v1986 = vshrl.u32 %v1985, 7
        %v1987 = vsub.s32 0, %v1986
        %v1988 = vrot.slane %v1950, %v1987
        %v1989 = vlaneseq
        %v1990 = vshrl.u32 %v1989, 7
        %v1991 = vsub.s32 1, %v1990
        %v1992 = vrot.slane %v1950, %v1991
        %v1993 = vlaneseq
        %v1994 = vshrl.u32 %v1993, 7
        %v1995 = vsub.s32 2, %v1994
        %v1996 = vrot.slane %v1950, %v1995
        %v1997 = vlaneseq
        %v1998 = vshrl.u32 %v1997, 7
        %v1999 = vsub.s32 3, %v1998
        %v2000 = vrot.slane %v1950, %v1999
        %v2001 = vlaneseq
        %v2002 = vshrl.u32 %v2001, 7
        %v2003 = vsub.s32 4, %v2002
        %v2004 = vrot.slane %v1950, %v2003
        %v2005 = vlaneseq
        %v2006 = vshrl.u32 %v2005, 7
        %v2007 = vsub.s32 5, %v2006
        %v2008 = vrot.slane %v1950, %v2007
        %v2009 = vlaneseq
        %v2010 = vshrl.u32 %v2009, 7
        %v2011 = vsub.s32 6, %v2010
        %v2012 = vrot.slane %v1950, %v2011
        %v2013 = vlaneseq
        %v2014 = vshrl.u32 %v2013, 7
        %v2015 = vsub.s32 7, %v2014
        %v2016 = vrot.slane %v1950, %v2015
        %2017 = vrot.lane.b32.xlu0 %v1956, 3
        %v2018 = vpop.permute.xlu0 %2017
        %2019 = vrot.lane.b32.xlu0 %v1960, 3
        %v2020 = vpop.permute.xlu0 %2019
        %2021 = vrot.lane.b32.xlu0 %v1964, 3
        %v2022 = vpop.permute.xlu0 %2021
        %2023 = vrot.lane.b32.xlu0 %v1968, 3
        %v2024 = vpop.permute.xlu0 %2023
        %2025 = vrot.lane.b32.xlu0 %v1972, 3
        %v2026 = vpop.permute.xlu0 %2025
        %2027 = vrot.lane.b32.xlu0 %v1976, 3
        %v2028 = vpop.permute.xlu0 %2027
        %2029 = vrot.lane.b32.xlu0 %v1980, 3
        %v2030 = vpop.permute.xlu0 %2029
        %2031 = vrot.lane.b32.xlu0 %v1984, 3
        %v2032 = vpop.permute.xlu0 %2031
        %2033 = vrot.lane.b32.xlu0 %v1988, 3
        %v2034 = vpop.permute.xlu0 %2033
        %2035 = vrot.lane.b32.xlu0 %v1992, 3
        %v2036 = vpop.permute.xlu0 %2035
        %2037 = vrot.lane.b32.xlu0 %v1996, 3
        %v2038 = vpop.permute.xlu0 %2037
        %2039 = vrot.lane.b32.xlu0 %v2000, 3
        %v2040 = vpop.permute.xlu0 %2039
        %2041 = vrot.lane.b32.xlu0 %v2004, 3
        %v2042 = vpop.permute.xlu0 %2041
        %2043 = vrot.lane.b32.xlu0 %v2008, 3
        %v2044 = vpop.permute.xlu0 %2043
        %2045 = vrot.lane.b32.xlu0 %v2012, 3
        %v2046 = vpop.permute.xlu0 %2045
        %2047 = vrot.lane.b32.xlu0 %v2016, 3
        %v2048 = vpop.permute.xlu0 %2047
        %vm2049 = vcmask 23552
        %v2050 = vsel %vm2049, %v2018, %v2020
        %v2051 = vsel %vm2049, %v2020, %v2022
        %v2052 = vsel %vm2049, %v2022, %v2024
        %v2053 = vsel %vm2049, %v2024, %v2026
        %v2054 = vsel %vm2049, %v2026, %v2028
        %v2055 = vsel %vm2049, %v2028, %v2030
        %v2056 = vsel %vm2049, %v2030, %v2032
        %v2057 = vsel %vm2049, %v2032, %v2034
        %v2058 = vsel %vm2049, %v2034, %v2036
        %v2059 = vsel %vm2049, %v2036, %v2038
        %v2060 = vsel %vm2049, %v2038, %v2040
        %v2061 = vsel %vm2049, %v2040, %v2042
        %v2062 = vsel %vm2049, %v2042, %v2044
        %v2063 = vsel %vm2049, %v2044, %v2046
        %v2064 = vsel %vm2049, %v2046, %v2048
        %v2081 = vsel %vm2049, 0.0, %v2018
        %s2082 = scalar_lea.vmem [#allocation2], 356
        %v2083 = vld [vmem:[%s2082] ss:$8 sm:$0xf]
        %v2084 = vld [vmem:[%s2082] ss:$8 sm:$0xf0]
        %v2085 = vor.u32 %v2083, %v2084
        %s2086 = scalar_lea.vmem [#allocation2], 420
        %v2087 = vld [vmem:[%s2086] ss:$8 sm:$0xf]
        %v2088 = vld [vmem:[%s2086] ss:$8 sm:$0xf0]
        %v2089 = vor.u32 %v2087, %v2088
        %s2090 = scalar_lea.vmem [#allocation2], 383
        %v2091 = vld [vmem:[%s2090] ss:$8 sm:$0xf]
        %v2092 = vld [vmem:[%s2090] ss:$8 sm:$0xf0]
        %v2093 = vor.u32 %v2091, %v2092
        %s2094 = scalar_lea.vmem [#allocation2], 447
        %v2095 = vld [vmem:[%s2094] ss:$8 sm:$0xf]
        %v2096 = vld [vmem:[%s2094] ss:$8 sm:$0xf0]
        %v2097 = vor.u32 %v2095, %v2096
        %v2098 = vadd.f32 %v2085, %v2093
        %v2099 = vadd.f32 %v2089, %v2097
        %s2100 = scalar_lea.vmem [#allocation2], 578
        %v2101 = vld [vmem:[%s2100] ss:$8 sm:$0xf]
        %v2102 = vld [vmem:[%s2100] ss:$8 sm:$0xf0]
        %v2103 = vor.u32 %v2101, %v2102
        %s2104 = scalar_lea.vmem [#allocation2], 642
        %v2105 = vld [vmem:[%s2104] ss:$8 sm:$0xf]
        %v2106 = vld [vmem:[%s2104] ss:$8 sm:$0xf0]
        %v2107 = vor.u32 %v2105, %v2106
        %v2108 = vadd.f32 %v2098, %v2103
        %v2109 = vadd.f32 %v2099, %v2107
        %v2112 = vlaneseq
        %v2113 = vshrl.u32 %v2112, 7
        %v2114 = vsub.s32 0, %v2113
        %v2115 = vrot.slane %v2108, %v2114
        %v2116 = vlaneseq
        %v2117 = vshrl.u32 %v2116, 7
        %v2118 = vsub.s32 1, %v2117
        %v2119 = vrot.slane %v2108, %v2118
        %v2120 = vlaneseq
        %v2121 = vshrl.u32 %v2120, 7
        %v2122 = vsub.s32 2, %v2121
        %v2123 = vrot.slane %v2108, %v2122
        %v2124 = vlaneseq
        %v2125 = vshrl.u32 %v2124, 7
        %v2126 = vsub.s32 3, %v2125
        %v2127 = vrot.slane %v2108, %v2126
        %v2128 = vlaneseq
        %v2129 = vshrl.u32 %v2128, 7
        %v2130 = vsub.s32 4, %v2129
        %v2131 = vrot.slane %v2108, %v2130
        %v2132 = vlaneseq
        %v2133 = vshrl.u32 %v2132, 7
        %v2134 = vsub.s32 5, %v2133
        %v2135 = vrot.slane %v2108, %v2134
        %v2136 = vlaneseq
        %v2137 = vshrl.u32 %v2136, 7
        %v2138 = vsub.s32 6, %v2137
        %v2139 = vrot.slane %v2108, %v2138
        %v2140 = vlaneseq
        %v2141 = vshrl.u32 %v2140, 7
        %v2142 = vsub.s32 7, %v2141
        %v2143 = vrot.slane %v2108, %v2142
        %v2144 = vlaneseq
        %v2145 = vshrl.u32 %v2144, 7
        %v2146 = vsub.s32 0, %v2145
        %v2147 = vrot.slane %v2109, %v2146
        %v2148 = vlaneseq
        %v2149 = vshrl.u32 %v2148, 7
        %v2150 = vsub.s32 1, %v2149
        %v2151 = vrot.slane %v2109, %v2150
        %v2152 = vlaneseq
        %v2153 = vshrl.u32 %v2152, 7
        %v2154 = vsub.s32 2, %v2153
        %v2155 = vrot.slane %v2109, %v2154
        %v2156 = vlaneseq
        %v2157 = vshrl.u32 %v2156, 7
        %v2158 = vsub.s32 3, %v2157
        %v2159 = vrot.slane %v2109, %v2158
        %v2160 = vlaneseq
        %v2161 = vshrl.u32 %v2160, 7
        %v2162 = vsub.s32 4, %v2161
        %v2163 = vrot.slane %v2109, %v2162
        %v2164 = vlaneseq
        %v2165 = vshrl.u32 %v2164, 7
        %v2166 = vsub.s32 5, %v2165
        %v2167 = vrot.slane %v2109, %v2166
        %v2168 = vlaneseq
        %v2169 = vshrl.u32 %v2168, 7
        %v2170 = vsub.s32 6, %v2169
        %v2171 = vrot.slane %v2109, %v2170
        %v2172 = vlaneseq
        %v2173 = vshrl.u32 %v2172, 7
        %v2174 = vsub.s32 7, %v2173
        %v2175 = vrot.slane %v2109, %v2174
        %v2192 = vadd.f32 %v2081, %v2115
        %v2193 = vadd.f32 %v2050, %v2119
        %v2194 = vadd.f32 %v2051, %v2123
        %v2195 = vadd.f32 %v2052, %v2127
        %v2196 = vadd.f32 %v2053, %v2131
        %v2197 = vadd.f32 %v2054, %v2135
        %v2198 = vadd.f32 %v2055, %v2139
        %v2199 = vadd.f32 %v2056, %v2143
        %v2200 = vadd.f32 %v2057, %v2147
        %v2201 = vadd.f32 %v2058, %v2151
        %v2202 = vadd.f32 %v2059, %v2155
        %v2203 = vadd.f32 %v2060, %v2159
        %v2204 = vadd.f32 %v2061, %v2163
        %v2205 = vadd.f32 %v2062, %v2167
        %v2206 = vadd.f32 %v2063, %v2171
        %v2207 = vadd.f32 %v2064, %v2175
        %s2208 = scalar_lea.vmem [#allocation2], 357
        %v2209 = vld [vmem:[%s2208] ss:$8 sm:$0xf]
        %v2210 = vld [vmem:[%s2208] ss:$8 sm:$0xf0]
        %v2211 = vor.u32 %v2209, %v2210
        %s2212 = scalar_lea.vmem [#allocation2], 421
        %v2213 = vld [vmem:[%s2212] ss:$8 sm:$0xf]
        %v2214 = vld [vmem:[%s2212] ss:$8 sm:$0xf0]
        %v2215 = vor.u32 %v2213, %v2214
        %s2216 = scalar_lea.vmem [#allocation2], 552
        %v2217 = vld [vmem:[%s2216] ss:$8 sm:$0xf]
        %v2218 = vld [vmem:[%s2216] ss:$8 sm:$0xf0]
        %v2219 = vor.u32 %v2217, %v2218
        %s2220 = scalar_lea.vmem [#allocation2], 616
        %v2221 = vld [vmem:[%s2220] ss:$8 sm:$0xf]
        %v2222 = vld [vmem:[%s2220] ss:$8 sm:$0xf0]
        %v2223 = vor.u32 %v2221, %v2222
        %v2224 = vadd.f32 %v2211, %v2219
        %v2225 = vadd.f32 %v2215, %v2223
        %s2226 = scalar_lea.vmem [#allocation2], 579
        %v2227 = vld [vmem:[%s2226] ss:$8 sm:$0xf]
        %v2228 = vld [vmem:[%s2226] ss:$8 sm:$0xf0]
        %v2229 = vor.u32 %v2227, %v2228
        %s2230 = scalar_lea.vmem [#allocation2], 643
        %v2231 = vld [vmem:[%s2230] ss:$8 sm:$0xf]
        %v2232 = vld [vmem:[%s2230] ss:$8 sm:$0xf0]
        %v2233 = vor.u32 %v2231, %v2232
        %v2234 = vadd.f32 %v2224, %v2229
        %v2235 = vadd.f32 %v2225, %v2233
        %v2238 = vlaneseq
        %v2239 = vshrl.u32 %v2238, 7
        %v2240 = vsub.s32 0, %v2239
        %v2241 = vrot.slane %v2234, %v2240
        %v2242 = vlaneseq
        %v2243 = vshrl.u32 %v2242, 7
        %v2244 = vsub.s32 1, %v2243
        %v2245 = vrot.slane %v2234, %v2244
        %v2246 = vlaneseq
        %v2247 = vshrl.u32 %v2246, 7
        %v2248 = vsub.s32 2, %v2247
        %v2249 = vrot.slane %v2234, %v2248
        %v2250 = vlaneseq
        %v2251 = vshrl.u32 %v2250, 7
        %v2252 = vsub.s32 3, %v2251
        %v2253 = vrot.slane %v2234, %v2252
        %v2254 = vlaneseq
        %v2255 = vshrl.u32 %v2254, 7
        %v2256 = vsub.s32 4, %v2255
        %v2257 = vrot.slane %v2234, %v2256
        %v2258 = vlaneseq
        %v2259 = vshrl.u32 %v2258, 7
        %v2260 = vsub.s32 5, %v2259
        %v2261 = vrot.slane %v2234, %v2260
        %v2262 = vlaneseq
        %v2263 = vshrl.u32 %v2262, 7
        %v2264 = vsub.s32 6, %v2263
        %v2265 = vrot.slane %v2234, %v2264
        %v2266 = vlaneseq
        %v2267 = vshrl.u32 %v2266, 7
        %v2268 = vsub.s32 7, %v2267
        %v2269 = vrot.slane %v2234, %v2268
        %v2270 = vlaneseq
        %v2271 = vshrl.u32 %v2270, 7
        %v2272 = vsub.s32 0, %v2271
        %v2273 = vrot.slane %v2235, %v2272
        %v2274 = vlaneseq
        %v2275 = vshrl.u32 %v2274, 7
        %v2276 = vsub.s32 1, %v2275
        %v2277 = vrot.slane %v2235, %v2276
        %v2278 = vlaneseq
        %v2279 = vshrl.u32 %v2278, 7
        %v2280 = vsub.s32 2, %v2279
        %v2281 = vrot.slane %v2235, %v2280
        %v2282 = vlaneseq
        %v2283 = vshrl.u32 %v2282, 7
        %v2284 = vsub.s32 3, %v2283
        %v2285 = vrot.slane %v2235, %v2284
        %v2286 = vlaneseq
        %v2287 = vshrl.u32 %v2286, 7
        %v2288 = vsub.s32 4, %v2287
        %v2289 = vrot.slane %v2235, %v2288
        %v2290 = vlaneseq
        %v2291 = vshrl.u32 %v2290, 7
        %v2292 = vsub.s32 5, %v2291
        %v2293 = vrot.slane %v2235, %v2292
        %v2294 = vlaneseq
        %v2295 = vshrl.u32 %v2294, 7
        %v2296 = vsub.s32 6, %v2295
        %v2297 = vrot.slane %v2235, %v2296
        %v2298 = vlaneseq
        %v2299 = vshrl.u32 %v2298, 7
        %v2300 = vsub.s32 7, %v2299
        %v2301 = vrot.slane %v2235, %v2300
        %2302 = vrot.lane.b32.xlu0 %v2241, 125
        %v2303 = vpop.permute.xlu0 %2302
        %2304 = vrot.lane.b32.xlu0 %v2245, 125
        %v2305 = vpop.permute.xlu0 %2304
        %2306 = vrot.lane.b32.xlu0 %v2249, 125
        %v2307 = vpop.permute.xlu0 %2306
        %2308 = vrot.lane.b32.xlu0 %v2253, 125
        %v2309 = vpop.permute.xlu0 %2308
        %2310 = vrot.lane.b32.xlu0 %v2257, 125
        %v2311 = vpop.permute.xlu0 %2310
        %2312 = vrot.lane.b32.xlu0 %v2261, 125
        %v2313 = vpop.permute.xlu0 %2312
        %2314 = vrot.lane.b32.xlu0 %v2265, 125
        %v2315 = vpop.permute.xlu0 %2314
        %2316 = vrot.lane.b32.xlu0 %v2269, 125
        %v2317 = vpop.permute.xlu0 %2316
        %2318 = vrot.lane.b32.xlu0 %v2273, 125
        %v2319 = vpop.permute.xlu0 %2318
        %2320 = vrot.lane.b32.xlu0 %v2277, 125
        %v2321 = vpop.permute.xlu0 %2320
        %2322 = vrot.lane.b32.xlu0 %v2281, 125
        %v2323 = vpop.permute.xlu0 %2322
        %2324 = vrot.lane.b32.xlu0 %v2285, 125
        %v2325 = vpop.permute.xlu0 %2324
        %2326 = vrot.lane.b32.xlu0 %v2289, 125
        %v2327 = vpop.permute.xlu0 %2326
        %2328 = vrot.lane.b32.xlu0 %v2293, 125
        %v2329 = vpop.permute.xlu0 %2328
        %2330 = vrot.lane.b32.xlu0 %v2297, 125
        %v2331 = vpop.permute.xlu0 %2330
        %2332 = vrot.lane.b32.xlu0 %v2301, 125
        %v2333 = vpop.permute.xlu0 %2332
        %vm2334 = vcmask 1022976
        %v2335 = vsel %vm2334, %v2303, %v2305
        %v2336 = vsel %vm2334, %v2305, %v2307
        %v2337 = vsel %vm2334, %v2307, %v2309
        %v2338 = vsel %vm2334, %v2309, %v2311
        %v2339 = vsel %vm2334, %v2311, %v2313
        %v2340 = vsel %vm2334, %v2313, %v2315
        %v2341 = vsel %vm2334, %v2315, %v2317
        %v2342 = vsel %vm2334, %v2317, %v2319
        %v2343 = vsel %vm2334, %v2319, %v2321
        %v2344 = vsel %vm2334, %v2321, %v2323
        %v2345 = vsel %vm2334, %v2323, %v2325
        %v2346 = vsel %vm2334, %v2325, %v2327
        %v2347 = vsel %vm2334, %v2327, %v2329
        %v2348 = vsel %vm2334, %v2329, %v2331
        %v2349 = vsel %vm2334, %v2331, %v2333
        %v2366 = vsel %vm2334, %v2333, 0.0
        %v2367 = vadd.f32 %v2192, %v2335
        %v2368 = vadd.f32 %v2193, %v2336
        %v2369 = vadd.f32 %v2194, %v2337
        %v2370 = vadd.f32 %v2195, %v2338
        %v2371 = vadd.f32 %v2196, %v2339
        %v2372 = vadd.f32 %v2197, %v2340
        %v2373 = vadd.f32 %v2198, %v2341
        %v2374 = vadd.f32 %v2199, %v2342
        %v2375 = vadd.f32 %v2200, %v2343
        %v2376 = vadd.f32 %v2201, %v2344
        %v2377 = vadd.f32 %v2202, %v2345
        %v2378 = vadd.f32 %v2203, %v2346
        %v2379 = vadd.f32 %v2204, %v2347
        %v2380 = vadd.f32 %v2205, %v2348
        %v2381 = vadd.f32 %v2206, %v2349
        %v2382 = vadd.f32 %v2207, %v2366
        %s2383 = sld [smem:[#allocation6 + $0x3]]
        %s2384 = sld [smem:[#allocation3 + $0x3]]
        %v2385 = vstv %s2384
        %v2386 = vadd.f32 %v2367, %v2385
        %v2387 = vadd.f32 %v2368, %v2385
        %v2388 = vadd.f32 %v2369, %v2385
        %v2389 = vadd.f32 %v2370, %v2385
        %v2390 = vadd.f32 %v2371, %v2385
        %v2391 = vadd.f32 %v2372, %v2385
        %v2392 = vadd.f32 %v2373, %v2385
        %v2393 = vadd.f32 %v2374, %v2385
        %v2394 = vadd.f32 %v2375, %v2385
        %v2395 = vadd.f32 %v2376, %v2385
        %v2396 = vadd.f32 %v2377, %v2385
        %v2397 = vadd.f32 %v2378, %v2385
        %v2398 = vadd.f32 %v2379, %v2385
        %v2399 = vadd.f32 %v2380, %v2385
        %v2400 = vadd.f32 %v2381, %v2385
        %v2401 = vadd.f32 %v2382, %v2385
        %v2402 = vmax.f32 %v2386, 0.0
        %v2403 = vmax.f32 %v2387, 0.0
        %v2404 = vmax.f32 %v2388, 0.0
        %v2405 = vmax.f32 %v2389, 0.0
        %v2406 = vmax.f32 %v2390, 0.0
        %v2407 = vmax.f32 %v2391, 0.0
        %v2408 = vmax.f32 %v2392, 0.0
        %v2409 = vmax.f32 %v2393, 0.0
        %v2410 = vmax.f32 %v2394, 0.0
        %v2411 = vmax.f32 %v2395, 0.0
        %v2412 = vmax.f32 %v2396, 0.0
        %v2413 = vmax.f32 %v2397, 0.0
        %v2414 = vmax.f32 %v2398, 0.0
        %v2415 = vmax.f32 %v2399, 0.0
        %v2416 = vmax.f32 %v2400, 0.0
        %v2417 = vmax.f32 %v2401, 0.0
        %v2418 = vstv %s2383
        %v2419 = vmul.f32 %v2418, %v2402
        %v2420 = vmul.f32 %v2418, %v2403
        %v2421 = vmul.f32 %v2418, %v2404
        %v2422 = vmul.f32 %v2418, %v2405
        %v2423 = vmul.f32 %v2418, %v2406
        %v2424 = vmul.f32 %v2418, %v2407
        %v2425 = vmul.f32 %v2418, %v2408
        %v2426 = vmul.f32 %v2418, %v2409
        %v2427 = vmul.f32 %v2418, %v2410
        %v2428 = vmul.f32 %v2418, %v2411
        %v2429 = vmul.f32 %v2418, %v2412
        %v2430 = vmul.f32 %v2418, %v2413
        %v2431 = vmul.f32 %v2418, %v2414
        %v2432 = vmul.f32 %v2418, %v2415
        %v2433 = vmul.f32 %v2418, %v2416
        %v2434 = vmul.f32 %v2418, %v2417
        %v2451 = vcombine.low %v2419, %v2420
        %v2452 = vcombine.low %v2421, %v2422
        %v2453 = vcombine.low %v2423, %v2424
        %v2454 = vcombine.low %v2425, %v2426
        %v2456 = vunpack.c.l.s4 1966171168
        %v2457 = vunpack.c.0.s8 %v2456
        %v2458 = vlaneseq
        %v2459 = vshrl.u32 %v2458, 7
        %v2460 = vsub.s32 %v2457, %v2459
        %v2461 = vrot.slane %v2451, %v2460
        %v2463 = vunpack.c.l.s4 1966171168
        %v2464 = vunpack.c.0.s8 %v2463
        %v2465 = vlaneseq
        %v2466 = vshrl.u32 %v2465, 7
        %v2467 = vsub.s32 %v2464, %v2466
        %v2468 = vrot.slane %v2452, %v2467
        %v2470 = vunpack.c.l.s4 1966171168
        %v2471 = vunpack.c.0.s8 %v2470
        %v2472 = vlaneseq
        %v2473 = vshrl.u32 %v2472, 7
        %v2474 = vsub.s32 %v2471, %v2473
        %v2475 = vrot.slane %v2453, %v2474
        %v2477 = vunpack.c.l.s4 1966171168
        %v2478 = vunpack.c.0.s8 %v2477
        %v2479 = vlaneseq
        %v2480 = vshrl.u32 %v2479, 7
        %v2481 = vsub.s32 %v2478, %v2480
        %v2482 = vrot.slane %v2454, %v2481
        %v2483 = vcombine.low %v2461, %v2468
        %v2484 = vcombine.low %v2475, %v2482
        %v2486 = vunpack.c.l.s4 1966171168
        %v2487 = vunpack.c.0.s8 %v2486
        %v2488 = vlaneseq
        %v2489 = vshrl.u32 %v2488, 7
        %v2490 = vsub.s32 %v2487, %v2489
        %v2491 = vrot.slane %v2483, %v2490
        %v2493 = vunpack.c.l.s4 1966171168
        %v2494 = vunpack.c.0.s8 %v2493
        %v2495 = vlaneseq
        %v2496 = vshrl.u32 %v2495, 7
        %v2497 = vsub.s32 %v2494, %v2496
        %v2498 = vrot.slane %v2484, %v2497
        %v2499 = vcombine.low %v2491, %v2498
        %v2500 = vcombine.low %v2427, %v2428
        %v2501 = vcombine.low %v2429, %v2430
        %v2502 = vcombine.low %v2431, %v2432
        %v2503 = vcombine.low %v2433, %v2434
        %v2505 = vunpack.c.l.s4 1966171168
        %v2506 = vunpack.c.0.s8 %v2505
        %v2507 = vlaneseq
        %v2508 = vshrl.u32 %v2507, 7
        %v2509 = vsub.s32 %v2506, %v2508
        %v2510 = vrot.slane %v2500, %v2509
        %v2512 = vunpack.c.l.s4 1966171168
        %v2513 = vunpack.c.0.s8 %v2512
        %v2514 = vlaneseq
        %v2515 = vshrl.u32 %v2514, 7
        %v2516 = vsub.s32 %v2513, %v2515
        %v2517 = vrot.slane %v2501, %v2516
        %v2519 = vunpack.c.l.s4 1966171168
        %v2520 = vunpack.c.0.s8 %v2519
        %v2521 = vlaneseq
        %v2522 = vshrl.u32 %v2521, 7
        %v2523 = vsub.s32 %v2520, %v2522
        %v2524 = vrot.slane %v2502, %v2523
        %v2526 = vunpack.c.l.s4 1966171168
        %v2527 = vunpack.c.0.s8 %v2526
        %v2528 = vlaneseq
        %v2529 = vshrl.u32 %v2528, 7
        %v2530 = vsub.s32 %v2527, %v2529
        %v2531 = vrot.slane %v2503, %v2530
        %v2532 = vcombine.low %v2510, %v2517
        %v2533 = vcombine.low %v2524, %v2531
        %v2535 = vunpack.c.l.s4 1966171168
        %v2536 = vunpack.c.0.s8 %v2535
        %v2537 = vlaneseq
        %v2538 = vshrl.u32 %v2537, 7
        %v2539 = vsub.s32 %v2536, %v2538
        %v2540 = vrot.slane %v2532, %v2539
        %v2542 = vunpack.c.l.s4 1966171168
        %v2543 = vunpack.c.0.s8 %v2542
        %v2544 = vlaneseq
        %v2545 = vshrl.u32 %v2544, 7
        %v2546 = vsub.s32 %v2543, %v2545
        %v2547 = vrot.slane %v2533, %v2546
        %v2548 = vcombine.low %v2540, %v2547
        %v2551 = vadd.f32 %v1921, %v2499
        %v2552 = vadd.f32 %v1922, %v2548
        %s2553 = scalar_lea.vmem [#allocation2], 532
        %v2554 = vld [vmem:[%s2553] ss:$8 sm:$0xf]
        %v2555 = vld [vmem:[%s2553] ss:$8 sm:$0xf0]
        %v2556 = vor.u32 %v2554, %v2555
        %s2557 = scalar_lea.vmem [#allocation2], 596
        %v2558 = vld [vmem:[%s2557] ss:$8 sm:$0xf]
        %v2559 = vld [vmem:[%s2557] ss:$8 sm:$0xf0]
        %v2560 = vor.u32 %v2558, %v2559
        %s2561 = scalar_lea.vmem [#allocation2], 660
        %v2562 = vld [vmem:[%s2561] ss:$8 sm:$0xf]
        %v2563 = vld [vmem:[%s2561] ss:$8 sm:$0x30]
        %v2564 = vor.u32 %v2562, %v2563
        %v2568 = vlaneseq
        %v2569 = vshrl.u32 %v2568, 7
        %v2570 = vsub.s32 0, %v2569
        %v2571 = vrot.slane %v2556, %v2570
        %v2572 = vlaneseq
        %v2573 = vshrl.u32 %v2572, 7
        %v2574 = vsub.s32 1, %v2573
        %v2575 = vrot.slane %v2556, %v2574
        %v2576 = vlaneseq
        %v2577 = vshrl.u32 %v2576, 7
        %v2578 = vsub.s32 2, %v2577
        %v2579 = vrot.slane %v2556, %v2578
        %v2580 = vlaneseq
        %v2581 = vshrl.u32 %v2580, 7
        %v2582 = vsub.s32 3, %v2581
        %v2583 = vrot.slane %v2556, %v2582
        %v2584 = vlaneseq
        %v2585 = vshrl.u32 %v2584, 7
        %v2586 = vsub.s32 4, %v2585
        %v2587 = vrot.slane %v2556, %v2586
        %v2588 = vlaneseq
        %v2589 = vshrl.u32 %v2588, 7
        %v2590 = vsub.s32 5, %v2589
        %v2591 = vrot.slane %v2556, %v2590
        %v2592 = vlaneseq
        %v2593 = vshrl.u32 %v2592, 7
        %v2594 = vsub.s32 6, %v2593
        %v2595 = vrot.slane %v2556, %v2594
        %v2596 = vlaneseq
        %v2597 = vshrl.u32 %v2596, 7
        %v2598 = vsub.s32 7, %v2597
        %v2599 = vrot.slane %v2556, %v2598
        %v2600 = vlaneseq
        %v2601 = vshrl.u32 %v2600, 7
        %v2602 = vsub.s32 0, %v2601
        %v2603 = vrot.slane %v2560, %v2602
        %v2604 = vlaneseq
        %v2605 = vshrl.u32 %v2604, 7
        %v2606 = vsub.s32 1, %v2605
        %v2607 = vrot.slane %v2560, %v2606
        %v2608 = vlaneseq
        %v2609 = vshrl.u32 %v2608, 7
        %v2610 = vsub.s32 2, %v2609
        %v2611 = vrot.slane %v2560, %v2610
        %v2612 = vlaneseq
        %v2613 = vshrl.u32 %v2612, 7
        %v2614 = vsub.s32 3, %v2613
        %v2615 = vrot.slane %v2560, %v2614
        %v2616 = vlaneseq
        %v2617 = vshrl.u32 %v2616, 7
        %v2618 = vsub.s32 4, %v2617
        %v2619 = vrot.slane %v2560, %v2618
        %v2620 = vlaneseq
        %v2621 = vshrl.u32 %v2620, 7
        %v2622 = vsub.s32 5, %v2621
        %v2623 = vrot.slane %v2560, %v2622
        %v2624 = vlaneseq
        %v2625 = vshrl.u32 %v2624, 7
        %v2626 = vsub.s32 6, %v2625
        %v2627 = vrot.slane %v2560, %v2626
        %v2628 = vlaneseq
        %v2629 = vshrl.u32 %v2628, 7
        %v2630 = vsub.s32 7, %v2629
        %v2631 = vrot.slane %v2560, %v2630
        %v2632 = vlaneseq
        %v2633 = vshrl.u32 %v2632, 7
        %v2634 = vsub.s32 0, %v2633
        %v2635 = vrot.slane %v2564, %v2634
        %v2636 = vlaneseq
        %v2637 = vshrl.u32 %v2636, 7
        %v2638 = vsub.s32 1, %v2637
        %v2639 = vrot.slane %v2564, %v2638
        %v2640 = vlaneseq
        %v2641 = vshrl.u32 %v2640, 7
        %v2642 = vsub.s32 2, %v2641
        %v2643 = vrot.slane %v2564, %v2642
        %v2644 = vlaneseq
        %v2645 = vshrl.u32 %v2644, 7
        %v2646 = vsub.s32 3, %v2645
        %v2647 = vrot.slane %v2564, %v2646
        %v2648 = vlaneseq
        %v2649 = vshrl.u32 %v2648, 7
        %v2650 = vsub.s32 4, %v2649
        %v2651 = vrot.slane %v2564, %v2650
        %v2652 = vlaneseq
        %v2653 = vshrl.u32 %v2652, 7
        %v2654 = vsub.s32 5, %v2653
        %v2655 = vrot.slane %v2564, %v2654
        %vm2678 = vcmask 1040384
        %v2679 = vsel %vm2678, %v2571, 0.0
        %v2680 = vsel %vm2678, %v2575, 0.0
        %v2681 = vadd.f32 %v2679, %v2680
        %v2682 = vsel %vm2678, %v2579, 0.0
        %v2683 = vadd.f32 %v2681, %v2682
        %v2684 = vsel %vm2678, %v2583, 0.0
        %v2685 = vadd.f32 %v2683, %v2684
        %v2686 = vsel %vm2678, %v2587, 0.0
        %v2687 = vadd.f32 %v2685, %v2686
        %v2688 = vsel %vm2678, %v2591, 0.0
        %v2689 = vadd.f32 %v2687, %v2688
        %v2690 = vsel %vm2678, %v2595, 0.0
        %v2691 = vadd.f32 %v2689, %v2690
        %v2692 = vsel %vm2678, %v2599, 0.0
        %v2693 = vadd.f32 %v2691, %v2692
        %v2694 = vsel %vm2678, %v2603, 0.0
        %v2695 = vadd.f32 %v2693, %v2694
        %v2696 = vsel %vm2678, %v2607, 0.0
        %v2697 = vadd.f32 %v2695, %v2696
        %v2698 = vsel %vm2678, %v2611, 0.0
        %v2699 = vadd.f32 %v2697, %v2698
        %v2700 = vsel %vm2678, %v2615, 0.0
        %v2701 = vadd.f32 %v2699, %v2700
        %v2702 = vsel %vm2678, %v2619, 0.0
        %v2703 = vadd.f32 %v2701, %v2702
        %v2704 = vsel %vm2678, %v2623, 0.0
        %v2705 = vadd.f32 %v2703, %v2704
        %v2706 = vsel %vm2678, %v2627, 0.0
        %v2707 = vadd.f32 %v2705, %v2706
        %v2708 = vsel %vm2678, %v2631, 0.0
        %v2709 = vadd.f32 %v2707, %v2708
        %v2710 = vsel %vm2678, %v2635, 0.0
        %v2711 = vadd.f32 %v2709, %v2710
        %v2712 = vsel %vm2678, %v2639, 0.0
        %v2713 = vadd.f32 %v2711, %v2712
        %v2714 = vsel %vm2678, %v2643, 0.0
        %v2715 = vadd.f32 %v2713, %v2714
        %v2716 = vsel %vm2678, %v2647, 0.0
        %v2717 = vadd.f32 %v2715, %v2716
        %v2718 = vsel %vm2678, %v2651, 0.0
        %v2719 = vadd.f32 %v2717, %v2718
        %v2720 = vsel %vm2678, %v2655, 0.0
        %v2721 = vadd.f32 %v2719, %v2720
        %2722 = vadd.xlane.f32.xlu0 %v2721
        %v2723 = vpop.xlane.xlu0 %2722
        %v2724 = vrot.slane %v2723, 4
        %v2725 = vadd.f32 %v2723, %v2724
        %v2726 = vrot.slane %v2725, 2
        %v2727 = vadd.f32 %v2725, %v2726
        %v2728 = vrot.slane %v2727, 1
        %v2729 = vadd.f32 %v2727, %v2728
        %s2730 = vtos %v2729
        %s2731 = smul.f32 %s2730, 0.00390625
        %s2732 = sld [smem:[#allocation3 + $0x4]]
        %s2733 = sadd.f32 %s2731, %s2732
        %s2734 = smax.f32 %s2733, 0.0
        %s2735 = sld [smem:[#allocation6 + $0x4]]
        %s2736 = smul.f32 %s2735, %s2734
        %v2737 = vstv %s2736
        %v2738 = vadd.f32 %v2551, %v2737
        %v2739 = vadd.f32 %v2552, %v2737
        %s2740 = sld [smem:[#allocation3 + $0x5]]
        %v2741 = vstv %s2740
        %v2742 = vadd.f32 %v2738, %v2741
        %v2743 = vadd.f32 %v2739, %v2741
        %v2744 = vmax.f32 %v2742, 0.0
        %v2745 = vmax.f32 %v2743, 0.0
        %2746 = vst [vmem:[%s217] sm:$0xff] %v2744
        %2747 = vst [vmem:[%s217 + $0x8] sm:$0xff] %v2745
        %s2748 = sand.u32 %s117, 1
        %s2749 = scalar_lea.sflag [#allocation4], %s2748
        %s2750 = sand.u32 %s117, 1
        %s2751 = smul.addr %s2750, 16
        %s2752 = scalar_lea.vmem [#allocation8], %s2751
        // Predicated region
        $region45: #{tpu_custom_call.1} parent=35 // pred_check
          %p2753 = pneg %p127
        $region46: #{tpu_custom_call.1} parent=35 // pred_check_branch
          %2755 = sbr.rel (%p2753) target = $region48
        $region47: #{tpu_custom_call.1} parent=35 // pred_region
          %s2757 = ssub.s32 256, 256
          %2758 = vsyncadd %s2749, %s2757
          %s2759 = smul.addr %s20, 16
          %s2760 = smul.addr %s2759, 16
          %s2761 = scalar_lea.hbm %s4, %s2760
          %s2763 = sshll.u32 %s2752, 4
          %s2764 = int_to_ptr.vmem [resolvable:$true] %s2763
          %2766 = dma.vmem_to_hbm [thread:$0]  %s2764, 256, %s2761, %s2749
        $region48: #{tpu_custom_call.1} parent=35 // pred_fallthru
          _
      $region36: #{tpu_custom_call.1} parent=5 // pred_fallthru
        _
      %p2767 = scmp.le.s32.totalorder 2, %s15
      // Predicated region
      $region49: #{tpu_custom_call.1} parent=5 // pred_check
        %p2768 = pneg %p2767
      $region50: #{tpu_custom_call.1} parent=5 // pred_check_branch
        %2770 = sbr.rel (%p2768) target = $region52
      $region51: #{tpu_custom_call.1} parent=5 // pred_region
        %s2771 = ssub.s32 %s15, 2
        // Predicated region
        $region53: #{tpu_custom_call.1} parent=51 // pred_check
          %p2772 = pneg %p133
        $region54: #{tpu_custom_call.1} parent=51 // pred_check_branch
          %2774 = sbr.rel (%p2772) target = $region56
        $region55: #{tpu_custom_call.1} parent=51 // pred_region
          %s2775 = sand.u32 %s118, 1
          %s2776 = scalar_lea.sflag [#allocation4], %s2775
          %s2777 = sand.u32 %s118, 1
          %s2778 = smul.addr %s2777, 16
          %s2779 = scalar_lea.vmem [#allocation8], %s2778
          %2780 = dma.done %s2776, 256
        $region56: #{tpu_custom_call.1} parent=51 // pred_fallthru
          _
      $region52: #{tpu_custom_call.1} parent=5 // pred_fallthru
        _
    $region6: #{tpu_custom_call.1} parent=1 // loop_footer
      %s19 = sadd.s32 1, %s15
    $region7: #{tpu_custom_call.1} parent=1 // loop_footer_branch
      %14 = sbr.rel target = $region3
    $region8: #{tpu_custom_call.1} parent=1 // loop_exit
      _
    %2781 = vsyncpa [#allocation4], 1
    %s2782 = scalar_lea.sflag [#allocation4], 1
    %2783 = vsyncpa %s2782, 1
    %2784 = vsyncpa [#allocation5], 1
    %s2785 = scalar_lea.sflag [#allocation5], 1
    %2786 = vsyncpa %s2785, 1
    %2787 = vsyncpa [#allocation7], 1

</llo_original>
